<compile_context>
chip_gen: v7x
topology: tpu7x:2x2x1
jax: 0.10.0
libtpu: 0.0.40
codegen_flags: <defaults>
</compile_context>

<pallas_src>
import jax
import jax.numpy as jnp
from jax.experimental import pallas as pl
from jax.experimental.pallas import tpu as pltpu


def _round_up(n, m):
    return ((n + m - 1) // m) * m


def _default_num_tiles():
    """2 batch tiles on dual-TensorCore v7x, 1 big tile on single-TC v5e/v6e."""
    try:
        kind = jax.devices()[0].device_kind.lower()
    except Exception:
        return 2
    return 2 if "v7" in kind else 1


def fcn_kernel(x_ref, w0_ref, b0_ref, w1_ref, b1_ref, w2_ref, b2_ref, o_ref):
    """Fused 3-layer MLP forward for one batch tile.

    Hidden layers use ReLU; the final layer is affine only (matches the
    PyTorch module).  Matmuls accumulate in f32 on the MXU; bias-add/ReLU are
    done in f32.  x arrives in f32 and is cast to the weight dtype in-kernel.
    """
    x = x_ref[...].astype(w0_ref.dtype)  # f32 -> bf16 cast (VPU, hides under MXU)
    # layer 0: Linear + ReLU
    h0 = jnp.dot(x, w0_ref[...], preferred_element_type=jnp.float32) + b0_ref[...]
    h0 = jnp.maximum(h0, 0.0).astype(w1_ref.dtype)
    # layer 1: Linear + ReLU
    h1 = jnp.dot(h0, w1_ref[...], preferred_element_type=jnp.float32) + b1_ref[...]
    h1 = jnp.maximum(h1, 0.0).astype(w2_ref.dtype)
    # layer 2: Linear (no activation)
    out = jnp.dot(h1, w2_ref[...], preferred_element_type=jnp.float32) + b2_ref[...]
    o_ref[...] = out.astype(o_ref.dtype)


def prepare_fcn_params(params, *, use_bf16=True):
    """One-time per-model prep: cast weights to the MXU operand dtype and
    reshape biases to (1, N) f32.  Keeps per-forward HBM traffic to x + output.
    """
    cdt = jnp.bfloat16 if use_bf16 else jnp.float32
    prepared = []
    for w, b in params:
        prepared.append((jnp.asarray(w, cdt),
                         jnp.asarray(b, jnp.float32).reshape(1, -1)))
    return prepared


def fcn_forward(x, prepared_params, *, num_batch_tiles=None, max_batch_tile=1024):
    """Run the fused FCN kernel, tiling only over the batch dimension.

    Feature dims are left at their native widths (full-array blocks / last
    dims are exempt from the 128-lane rule).  Only the batch dim is padded,
    and only when it is not a multiple of the chosen batch tile.
    """
    (w0, b0), (w1, b1), (w2, b2) = prepared_params
    B, in_feats = x.shape
    assert w0.shape[0] == in_feats
    h0_dim = w0.shape[1]
    h1_dim = w1.shape[1]
    out_feats = w2.shape[1]

    if num_batch_tiles is None:
        num_batch_tiles = _default_num_tiles()

    SUB = 16  # sublane multiple (covers f32 and bf16 packing)
    bt = _round_up(pl.cdiv(B, max(num_batch_tiles, 1)), SUB)
    bt = min(bt, _round_up(max_batch_tile, SUB))
    n_steps = pl.cdiv(B, bt)
    B_p = n_steps * bt

    x_in = x if B_p == B else jnp.pad(x, ((0, B_p - B), (0, 0)))
    x_in = x_in.astype(jnp.float32)

    full = lambda shape: pl.BlockSpec(shape, lambda i: (0, 0))

    out = pl.pallas_call(
        fcn_kernel,
        out_shape=jax.ShapeDtypeStruct((B_p, out_feats), jnp.float32),
        grid=(n_steps,),
        in_specs=[
            pl.BlockSpec((bt, in_feats), lambda i: (i, 0)),  # x tile (native width)
            full((in_feats, h0_dim)),   # w0
            full((1, h0_dim)),          # b0
            full((h0_dim, h1_dim)),     # w1
            full((1, h1_dim)),          # b1
            full((h1_dim, out_feats)),  # w2
            full((1, out_feats)),       # b2
        ],
        out_specs=pl.BlockSpec((bt, out_feats), lambda i: (i, 0)),
        compiler_params=pltpu.CompilerParams(
            dimension_semantics=("parallel",),
        ),
    )(x_in, w0, b0, w1, b1, w2, b2)

    return out if B_p == B else out[:B]


def init_fcn_params(key, in_feats, hidden_neurons, out_feats):
    """Deterministic parameter init mimicking nn.Linear's uniform(-1/sqrt(fan_in), ...)."""
    dims = [in_feats] + list(hidden_neurons) + [out_feats]
    params = []
    for i in range(len(dims) - 1):
        fan_in, fan_out = dims[i], dims[i + 1]
        key, kw, kb = jax.random.split(key, 3)
        bound = 1.0 / (fan_in ** 0.5)
        w = jax.random.uniform(kw, (fan_in, fan_out), jnp.float32, -bound, bound)
        b = jax.random.uniform(kb, (fan_out,), jnp.float32, -bound, bound)
        params.append((w, b))
    return params


def fcn_reference(x, params, *, use_bf16=False):
    """Plain-JAX reference mirroring the kernel's dtype handling."""
    cdt = jnp.bfloat16 if use_bf16 else jnp.float32
    h = x.astype(cdt)
    n = len(params)
    for i, (w, b) in enumerate(params):
        h = jnp.dot(h, w.astype(cdt), preferred_element_type=jnp.float32) + b
        if i != n - 1:
            h = jnp.maximum(h, 0.0).astype(cdt)
    return h.astype(jnp.float32)


if __name__ == "__main__":
    key = jax.random.PRNGKey(0)
    key, kx = jax.random.split(key)

    batch = 512
    in_feats = 32
    hidden_neurons = [128, 64]
    out_feats = 16

    x = jax.random.normal(kx, (batch, in_feats), jnp.float32)
    params = init_fcn_params(key, in_feats, hidden_neurons, out_feats)

    # f32-operand path: tight tolerance vs the f32 reference.
    p_f32 = prepare_fcn_params(params, use_bf16=False)
    out_f32 = jax.block_until_ready(fcn_forward(x, p_f32))
    ref_f32 = fcn_reference(x, params, use_bf16=False)
    assert out_f32.shape == (batch, out_feats)
    assert jnp.allclose(out_f32, ref_f32, atol=1e-3, rtol=1e-3), "f32 mismatch vs reference"

    # bf16-operand path (recommended on v5e/v6e/v7x): compare vs bf16-cast reference.
    p_bf16 = prepare_fcn_params(params, use_bf16=True)
    out_bf16 = jax.block_until_ready(fcn_forward(x, p_bf16))
    ref_bf16 = fcn_reference(x, params, use_bf16=True)
    assert out_bf16.shape == (batch, out_feats)
    assert jnp.allclose(out_bf16, ref_bf16, atol=2e-2, rtol=2e-2), "bf16 mismatch vs reference"

    print("KERNEL_OK")
</pallas_src>

<mosaic_0001>
module attributes {stable_mosaic.version = 11 : i64} {
  func.func @fcn_kernel(%arg0: i32, %arg1: memref<512x32xf32, #tpu.memory_space<vmem>>, %arg2: memref<32x128xf32, #tpu.memory_space<vmem>>, %arg3: memref<1x128xf32, #tpu.memory_space<vmem>>, %arg4: memref<128x64xf32, #tpu.memory_space<vmem>>, %arg5: memref<1x64xf32, #tpu.memory_space<vmem>>, %arg6: memref<64x16xf32, #tpu.memory_space<vmem>>, %arg7: memref<1x16xf32, #tpu.memory_space<vmem>>, %arg8: memref<512x16xf32, #tpu.memory_space<vmem>>) attributes {dimension_semantics = [#tpu.dimension_semantics<parallel>], iteration_bounds = array<i64: 1>, scalar_prefetch = 0 : i64, scratch_operands = 0 : i64, tpu.core_type = #tpu.core_type<tc>, window_params = [{transform_indices = @transform_0, window_bounds = array<i64: 512, 32>}, {pipeline_mode = #tpu.pipeline_mode<synchronous>, transform_indices = @transform_1, window_bounds = array<i64: 32, 128>}, {pipeline_mode = #tpu.pipeline_mode<synchronous>, transform_indices = @transform_2, window_bounds = array<i64: 1, 128>}, {pipeline_mode = #tpu.pipeline_mode<synchronous>, transform_indices = @transform_3, window_bounds = array<i64: 128, 64>}, {pipeline_mode = #tpu.pipeline_mode<synchronous>, transform_indices = @transform_4, window_bounds = array<i64: 1, 64>}, {pipeline_mode = #tpu.pipeline_mode<synchronous>, transform_indices = @transform_5, window_bounds = array<i64: 64, 16>}, {pipeline_mode = #tpu.pipeline_mode<synchronous>, transform_indices = @transform_6, window_bounds = array<i64: 1, 16>}, {transform_indices = @transform_7, window_bounds = array<i64: 512, 16>}]} {
    %c0 = arith.constant 0 : index
    %c0_0 = arith.constant 0 : index
    %0 = vector.load %arg1[%c0, %c0_0] : memref<512x32xf32, #tpu.memory_space<vmem>>, vector<512x32xf32>
    %c0_1 = arith.constant 0 : index
    %c0_2 = arith.constant 0 : index
    %1 = vector.load %arg2[%c0_1, %c0_2] : memref<32x128xf32, #tpu.memory_space<vmem>>, vector<32x128xf32>
    %cst = arith.constant dense<0.000000e+00> : vector<512x128xf32>
    %2 = tpu.matmul %0, %1, %cst {dimension_numbers = #tpu.dot_dimension_numbers<[1], [0], [0], [1], [0, 0, 1, 1], [], []>} : vector<512x32xf32>, vector<32x128xf32>, vector<512x128xf32> -> vector<512x128xf32>
    %c0_3 = arith.constant 0 : index
    %c0_4 = arith.constant 0 : index
    %3 = vector.load %arg3[%c0_3, %c0_4] : memref<1x128xf32, #tpu.memory_space<vmem>>, vector<1x128xf32>
    %4 = vector.broadcast %3 : vector<1x128xf32> to vector<512x128xf32>
    %5 = arith.addf %2, %4 : vector<512x128xf32>
    %cst_5 = arith.constant 0.000000e+00 : f32
    %6 = vector.broadcast %cst_5 : f32 to vector<512x128xf32>
    %7 = arith.maximumf %5, %6 : vector<512x128xf32>
    %c0_6 = arith.constant 0 : index
    %c0_7 = arith.constant 0 : index
    %8 = vector.load %arg4[%c0_6, %c0_7] : memref<128x64xf32, #tpu.memory_space<vmem>>, vector<128x64xf32>
    %cst_8 = arith.constant dense<0.000000e+00> : vector<512x64xf32>
    %9 = tpu.matmul %7, %8, %cst_8 {dimension_numbers = #tpu.dot_dimension_numbers<[1], [0], [0], [1], [0, 0, 1, 1], [], []>} : vector<512x128xf32>, vector<128x64xf32>, vector<512x64xf32> -> vector<512x64xf32>
    %c0_9 = arith.constant 0 : index
    %c0_10 = arith.constant 0 : index
    %10 = vector.load %arg5[%c0_9, %c0_10] : memref<1x64xf32, #tpu.memory_space<vmem>>, vector<1x64xf32>
    %11 = vector.broadcast %10 : vector<1x64xf32> to vector<512x64xf32>
    %12 = arith.addf %9, %11 : vector<512x64xf32>
    %cst_11 = arith.constant 0.000000e+00 : f32
    %13 = vector.broadcast %cst_11 : f32 to vector<512x64xf32>
    %14 = arith.maximumf %12, %13 : vector<512x64xf32>
    %c0_12 = arith.constant 0 : index
    %c0_13 = arith.constant 0 : index
    %15 = vector.load %arg6[%c0_12, %c0_13] : memref<64x16xf32, #tpu.memory_space<vmem>>, vector<64x16xf32>
    %cst_14 = arith.constant dense<0.000000e+00> : vector<512x16xf32>
    %16 = tpu.matmul %14, %15, %cst_14 {dimension_numbers = #tpu.dot_dimension_numbers<[1], [0], [0], [1], [0, 0, 1, 1], [], []>} : vector<512x64xf32>, vector<64x16xf32>, vector<512x16xf32> -> vector<512x16xf32>
    %c0_15 = arith.constant 0 : index
    %c0_16 = arith.constant 0 : index
    %17 = vector.load %arg7[%c0_15, %c0_16] : memref<1x16xf32, #tpu.memory_space<vmem>>, vector<1x16xf32>
    %18 = vector.broadcast %17 : vector<1x16xf32> to vector<512x16xf32>
    %19 = arith.addf %16, %18 : vector<512x16xf32>
    %c0_17 = arith.constant 0 : index
    %c0_18 = arith.constant 0 : index
    %20 = vector.load %arg8[%c0_17, %c0_18] : memref<512x16xf32, #tpu.memory_space<vmem>>, vector<512x16xf32>
    tpu.vector_store %arg8[%c0_17, %c0_18], %19 {strides = array<i32>} : memref<512x16xf32, #tpu.memory_space<vmem>>, vector<512x16xf32>,
    return
  }
  func.func @transform_0(%arg0: i32) -> (i32, i32) {
    %c0_i32 = arith.constant 0 : i32
    %c0_i32_0 = arith.constant 0 : i32
    return %arg0, %c0_i32 : i32, i32
  }
  func.func @transform_1(%arg0: i32) -> (i32, i32) {
    %c0_i32 = arith.constant 0 : i32
    %c0_i32_0 = arith.constant 0 : i32
    %c0_i32_1 = arith.constant 0 : i32
    return %c0_i32, %c0_i32_0 : i32, i32
  }
  func.func @transform_2(%arg0: i32) -> (i32, i32) {
    %c0_i32 = arith.constant 0 : i32
    %c0_i32_0 = arith.constant 0 : i32
    %c0_i32_1 = arith.constant 0 : i32
    return %c0_i32, %c0_i32_0 : i32, i32
  }
  func.func @transform_3(%arg0: i32) -> (i32, i32) {
    %c0_i32 = arith.constant 0 : i32
    %c0_i32_0 = arith.constant 0 : i32
    %c0_i32_1 = arith.constant 0 : i32
    return %c0_i32, %c0_i32_0 : i32, i32
  }
  func.func @transform_4(%arg0: i32) -> (i32, i32) {
    %c0_i32 = arith.constant 0 : i32
    %c0_i32_0 = arith.constant 0 : i32
    %c0_i32_1 = arith.constant 0 : i32
    return %c0_i32, %c0_i32_0 : i32, i32
  }
  func.func @transform_5(%arg0: i32) -> (i32, i32) {
    %c0_i32 = arith.constant 0 : i32
    %c0_i32_0 = arith.constant 0 : i32
    %c0_i32_1 = arith.constant 0 : i32
    return %c0_i32, %c0_i32_0 : i32, i32
  }
  func.func @transform_6(%arg0: i32) -> (i32, i32) {
    %c0_i32 = arith.constant 0 : i32
    %c0_i32_0 = arith.constant 0 : i32
    %c0_i32_1 = arith.constant 0 : i32
    return %c0_i32, %c0_i32_0 : i32, i32
  }
  func.func @transform_7(%arg0: i32) -> (i32, i32) {
    %c0_i32 = arith.constant 0 : i32
    %c0_i32_0 = arith.constant 0 : i32
    return %arg0, %c0_i32 : i32, i32
  }
}

</mosaic_0001>

<llo_original>
// kernel: tpu_custom_call.1
$region0: #{tpu_custom_call.1}
  #allocation0 [shape = 'u32[]', space=smem, size = 0x4, offset = 0x4, fixed_abs, tag = 'smem constant byte address 0x4 - core index']
  #allocation1 [shape = 'u32[144,128]{1,0:T(1,128)}', space=vmem, size = 0x12000, scoped, tag = 'internal scratch']
  %s0 = inlined_call_operand.vmem [shape: f32[512,32], index: 0, kind: input, shape index: {}]
  %s1 = inlined_call_operand.vmem [shape: f32[32,128], index: 1, kind: input, shape index: {}]
  %s2 = inlined_call_operand.vmem [shape: f32[1,128], index: 2, kind: input, shape index: {}]
  %s3 = inlined_call_operand.vmem [shape: f32[128,64], index: 3, kind: input, shape index: {}]
  %s4 = inlined_call_operand.vmem [shape: f32[1,64], index: 4, kind: input, shape index: {}]
  %s5 = inlined_call_operand.vmem [shape: f32[64,16], index: 5, kind: input, shape index: {}]
  %s6 = inlined_call_operand.vmem [shape: f32[1,16], index: 6, kind: input, shape index: {}]
  %s7 = inlined_call_operand.vmem [shape: f32[512,16], index: 7, kind: output, shape index: {}]
  %s8 = sld [smem:[#allocation0]]
  $region38: #{tpu_custom_call.1} parent=0
    _
  %s10 = ssub.s32 1, %s8
  %s11 = scalar_select 0, %s10, %s8
  // Predicated region
  $region2: #{tpu_custom_call.1} parent=0 // pred_check
    _
  $region3: #{tpu_custom_call.1} parent=0 // pred_check_branch
    %13 = sbr.rel (0) target = $region5
  $region4: #{tpu_custom_call.1} parent=0 // pred_region
    _
  $region5: #{tpu_custom_call.1} parent=0 // pred_fallthru
    _
  // Predicated region
  $region6: #{tpu_custom_call.1} parent=0 // pred_check
    _
  $region7: #{tpu_custom_call.1} parent=0 // pred_check_branch
    %15 = sbr.rel (0) target = $region9
  $region8: #{tpu_custom_call.1} parent=0 // pred_region
    _
  $region9: #{tpu_custom_call.1} parent=0 // pred_fallthru
    _
  // Predicated region
  $region10: #{tpu_custom_call.1} parent=0 // pred_check
    _
  $region11: #{tpu_custom_call.1} parent=0 // pred_check_branch
    %17 = sbr.rel (0) target = $region13
  $region12: #{tpu_custom_call.1} parent=0 // pred_region
    _
  $region13: #{tpu_custom_call.1} parent=0 // pred_fallthru
    _
  // Predicated region
  $region14: #{tpu_custom_call.1} parent=0 // pred_check
    _
  $region15: #{tpu_custom_call.1} parent=0 // pred_check_branch
    %19 = sbr.rel (0) target = $region17
  $region16: #{tpu_custom_call.1} parent=0 // pred_region
    _
  $region17: #{tpu_custom_call.1} parent=0 // pred_fallthru
    _
  // Predicated region
  $region18: #{tpu_custom_call.1} parent=0 // pred_check
    _
  $region19: #{tpu_custom_call.1} parent=0 // pred_check_branch
    %21 = sbr.rel (0) target = $region21
  $region20: #{tpu_custom_call.1} parent=0 // pred_region
    _
  $region21: #{tpu_custom_call.1} parent=0 // pred_fallthru
    _
  // Predicated region
  $region22: #{tpu_custom_call.1} parent=0 // pred_check
    _
  $region23: #{tpu_custom_call.1} parent=0 // pred_check_branch
    %23 = sbr.rel (0) target = $region25
  $region24: #{tpu_custom_call.1} parent=0 // pred_region
    _
  $region25: #{tpu_custom_call.1} parent=0 // pred_fallthru
    _
  // Predicated region
  $region26: #{tpu_custom_call.1} parent=0 // pred_check
    _
  $region27: #{tpu_custom_call.1} parent=0 // pred_check_branch
    %25 = sbr.rel (0) target = $region29
  $region28: #{tpu_custom_call.1} parent=0 // pred_region
    _
  $region29: #{tpu_custom_call.1} parent=0 // pred_fallthru
    _
  %v26 = vld [vmem:[%s0] sm:$0xff]
  %v27 = vld [vmem:[%s0 + $0x8] sm:$0xff]
  %v28 = vld [vmem:[%s0 + $0x10] sm:$0xff]
  %v29 = vld [vmem:[%s0 + $0x18] sm:$0xff]
  %v30 = vld [vmem:[%s0 + $0x20] sm:$0xff]
  %v31 = vld [vmem:[%s0 + $0x28] sm:$0xff]
  %v32 = vld [vmem:[%s0 + $0x30] sm:$0xff]
  %v33 = vld [vmem:[%s0 + $0x38] sm:$0xff]
  %v34 = vld [vmem:[%s0 + $0x40] sm:$0xff]
  %v35 = vld [vmem:[%s0 + $0x48] sm:$0xff]
  %v36 = vld [vmem:[%s0 + $0x50] sm:$0xff]
  %v37 = vld [vmem:[%s0 + $0x58] sm:$0xff]
  %v38 = vld [vmem:[%s0 + $0x60] sm:$0xff]
  %v39 = vld [vmem:[%s0 + $0x68] sm:$0xff]
  %v40 = vld [vmem:[%s0 + $0x70] sm:$0xff]
  %v41 = vld [vmem:[%s0 + $0x78] sm:$0xff]
  %v42 = vld [vmem:[%s0 + $0x80] sm:$0xff]
  %v43 = vld [vmem:[%s0 + $0x88] sm:$0xff]
  %v44 = vld [vmem:[%s0 + $0x90] sm:$0xff]
  %v45 = vld [vmem:[%s0 + $0x98] sm:$0xff]
  %v46 = vld [vmem:[%s0 + $0xa0] sm:$0xff]
  %v47 = vld [vmem:[%s0 + $0xa8] sm:$0xff]
  %v48 = vld [vmem:[%s0 + $0xb0] sm:$0xff]
  %v49 = vld [vmem:[%s0 + $0xb8] sm:$0xff]
  %v50 = vld [vmem:[%s0 + $0xc0] sm:$0xff]
  %v51 = vld [vmem:[%s0 + $0xc8] sm:$0xff]
  %v52 = vld [vmem:[%s0 + $0xd0] sm:$0xff]
  %v53 = vld [vmem:[%s0 + $0xd8] sm:$0xff]
  %v54 = vld [vmem:[%s0 + $0xe0] sm:$0xff]
  %v55 = vld [vmem:[%s0 + $0xe8] sm:$0xff]
  %v56 = vld [vmem:[%s0 + $0xf0] sm:$0xff]
  %v57 = vld [vmem:[%s0 + $0xf8] sm:$0xff]
  %v58 = vld [vmem:[%s0 + $0x100] sm:$0xff]
  %v59 = vld [vmem:[%s0 + $0x108] sm:$0xff]
  %v60 = vld [vmem:[%s0 + $0x110] sm:$0xff]
  %v61 = vld [vmem:[%s0 + $0x118] sm:$0xff]
  %v62 = vld [vmem:[%s0 + $0x120] sm:$0xff]
  %v63 = vld [vmem:[%s0 + $0x128] sm:$0xff]
  %v64 = vld [vmem:[%s0 + $0x130] sm:$0xff]
  %v65 = vld [vmem:[%s0 + $0x138] sm:$0xff]
  %v66 = vld [vmem:[%s0 + $0x140] sm:$0xff]
  %v67 = vld [vmem:[%s0 + $0x148] sm:$0xff]
  %v68 = vld [vmem:[%s0 + $0x150] sm:$0xff]
  %v69 = vld [vmem:[%s0 + $0x158] sm:$0xff]
  %v70 = vld [vmem:[%s0 + $0x160] sm:$0xff]
  %v71 = vld [vmem:[%s0 + $0x168] sm:$0xff]
  %v72 = vld [vmem:[%s0 + $0x170] sm:$0xff]
  %v73 = vld [vmem:[%s0 + $0x178] sm:$0xff]
  %v74 = vld [vmem:[%s0 + $0x180] sm:$0xff]
  %v75 = vld [vmem:[%s0 + $0x188] sm:$0xff]
  %v76 = vld [vmem:[%s0 + $0x190] sm:$0xff]
  %v77 = vld [vmem:[%s0 + $0x198] sm:$0xff]
  %v78 = vld [vmem:[%s0 + $0x1a0] sm:$0xff]
  %v79 = vld [vmem:[%s0 + $0x1a8] sm:$0xff]
  %v80 = vld [vmem:[%s0 + $0x1b0] sm:$0xff]
  %v81 = vld [vmem:[%s0 + $0x1b8] sm:$0xff]
  %v82 = vld [vmem:[%s0 + $0x1c0] sm:$0xff]
  %v83 = vld [vmem:[%s0 + $0x1c8] sm:$0xff]
  %v84 = vld [vmem:[%s0 + $0x1d0] sm:$0xff]
  %v85 = vld [vmem:[%s0 + $0x1d8] sm:$0xff]
  %v86 = vld [vmem:[%s0 + $0x1e0] sm:$0xff]
  %v87 = vld [vmem:[%s0 + $0x1e8] sm:$0xff]
  %v88 = vld [vmem:[%s0 + $0x1f0] sm:$0xff]
  %v89 = vld [vmem:[%s0 + $0x1f8] sm:$0xff]
  %v90 = vld [vmem:[%s1] sm:$0xff]
  %v91 = vld [vmem:[%s1 + $0x8] sm:$0xff]
  %v92 = vld [vmem:[%s1 + $0x10] sm:$0xff]
  %v93 = vld [vmem:[%s1 + $0x18] sm:$0xff]
  %v94 = vld [vmem:[%s2] sm:$0x1]
  %v96 = vlaneseq
  %v97 = vshrl.u32 %v96, 7
  %v98 = vsub.s32 0, %v97
  %v99 = vrot.slane %v94, %v98
  %vm101 = vcmask 261120
  %v103 = vsel %vm101, %v26, 0
  %v106 = vsel %vm101, %v27, 0
  %v109 = vsel %vm101, %v28, 0
  %v112 = vsel %vm101, %v29, 0
  %v115 = vsel %vm101, %v30, 0
  %v118 = vsel %vm101, %v31, 0
  %v121 = vsel %vm101, %v32, 0
  %v124 = vsel %vm101, %v33, 0
  %v127 = vsel %vm101, %v34, 0
  %v130 = vsel %vm101, %v35, 0
  %v133 = vsel %vm101, %v36, 0
  %v136 = vsel %vm101, %v37, 0
  %v139 = vsel %vm101, %v38, 0
  %v142 = vsel %vm101, %v39, 0
  %v145 = vsel %vm101, %v40, 0
  %v148 = vsel %vm101, %v41, 0
  %v151 = vsel %vm101, %v42, 0
  %v154 = vsel %vm101, %v43, 0
  %v157 = vsel %vm101, %v44, 0
  %v160 = vsel %vm101, %v45, 0
  %v163 = vsel %vm101, %v46, 0
  %v166 = vsel %vm101, %v47, 0
  %v169 = vsel %vm101, %v48, 0
  %v172 = vsel %vm101, %v49, 0
  %v175 = vsel %vm101, %v50, 0
  %v178 = vsel %vm101, %v51, 0
  %v181 = vsel %vm101, %v52, 0
  %v184 = vsel %vm101, %v53, 0
  %v187 = vsel %vm101, %v54, 0
  %v190 = vsel %vm101, %v55, 0
  %v193 = vsel %vm101, %v56, 0
  %v196 = vsel %vm101, %v57, 0
  %v199 = vsel %vm101, %v58, 0
  %v202 = vsel %vm101, %v59, 0
  %v205 = vsel %vm101, %v60, 0
  %v208 = vsel %vm101, %v61, 0
  %v211 = vsel %vm101, %v62, 0
  %v214 = vsel %vm101, %v63, 0
  %v217 = vsel %vm101, %v64, 0
  %v220 = vsel %vm101, %v65, 0
  %v223 = vsel %vm101, %v66, 0
  %v226 = vsel %vm101, %v67, 0
  %v229 = vsel %vm101, %v68, 0
  %v232 = vsel %vm101, %v69, 0
  %v235 = vsel %vm101, %v70, 0
  %v238 = vsel %vm101, %v71, 0
  %v241 = vsel %vm101, %v72, 0
  %v244 = vsel %vm101, %v73, 0
  %v247 = vsel %vm101, %v74, 0
  %v250 = vsel %vm101, %v75, 0
  %v253 = vsel %vm101, %v76, 0
  %v256 = vsel %vm101, %v77, 0
  %v259 = vsel %vm101, %v78, 0
  %v262 = vsel %vm101, %v79, 0
  %v265 = vsel %vm101, %v80, 0
  %v268 = vsel %vm101, %v81, 0
  %v271 = vsel %vm101, %v82, 0
  %v274 = vsel %vm101, %v83, 0
  %v277 = vsel %vm101, %v84, 0
  %v280 = vsel %vm101, %v85, 0
  %v283 = vsel %vm101, %v86, 0
  %v286 = vsel %vm101, %v87, 0
  %v289 = vsel %vm101, %v88, 0
  %v292 = vsel %vm101, %v89, 0
  %294 = vmatprep.subr.mxu0 0.0
  %295 = vmatpush1.msra.mxu0 %v90
  %296 = vmatprep.subr.mxu0 0.0
  %297 = vmatpush1.msra.mxu0 %v91
  %298 = vmatprep.subr.mxu0 0.0
  %299 = vmatpush1.msra.mxu0 %v92
  %300 = vmatprep.subr.mxu0 0.0
  %301 = vmatpush1.msra.mxu0 %v93
  %302 = vmatprep.subr.mxu0 0.0
  %303 = vmatpush1.msra.mxu0 0.0
  %304 = vmatprep.subr.mxu0 0.0
  %305 = vmatpush1.msra.mxu0 0.0
  %306 = vmatprep.subr.mxu0 0.0
  %307 = vmatpush1.msra.mxu0 0.0
  %308 = vmatprep.subr.mxu0 0.0
  %309 = vmatpush1.msra.mxu0 0.0
  %310 = vmatprep.subr.mxu0 0.0
  %311 = vmatpush1.msra.mxu0 0.0
  %312 = vmatprep.subr.mxu0 0.0
  %313 = vmatpush1.msra.mxu0 0.0
  %314 = vmatprep.subr.mxu0 0.0
  %315 = vmatpush1.msra.mxu0 0.0
  %316 = vmatprep.subr.mxu0 0.0
  %317 = vmatpush1.msra.mxu0 0.0
  %318 = vmatprep.subr.mxu0 0.0
  %319 = vmatpush1.msra.mxu0 0.0
  %320 = vmatprep.subr.mxu0 0.0
  %321 = vmatpush1.msra.mxu0 0.0
  %322 = vmatprep.subr.mxu0 0.0
  %323 = vmatpush1.msra.mxu0 0.0
  %324 = vmatprep.subr.mxu0 0.0
  %325 = vmatpush1.msra.mxu0 0.0
  %326 = vmatprep.subr.mxu0 0.0
  %327 = vmatpush1.msra.mxu0 0.0
  %328 = vmatprep.subr.mxu0 0.0
  %329 = vmatpush1.msra.mxu0 0.0
  %330 = vmatprep.subr.mxu0 0.0
  %331 = vmatpush1.msra.mxu0 0.0
  %332 = vmatprep.subr.mxu0 0.0
  %333 = vmatpush1.msra.mxu0 0.0
  %334 = vmatprep.subr.mxu0 0.0
  %335 = vmatpush1.msra.mxu0 0.0
  %336 = vmatprep.subr.mxu0 0.0
  %337 = vmatpush1.msra.mxu0 0.0
  %338 = vmatprep.subr.mxu0 0.0
  %339 = vmatpush1.msra.mxu0 0.0
  %340 = vmatprep.subr.mxu0 0.0
  %341 = vmatpush1.msra.mxu0 0.0
  %342 = vmatprep.subr.mxu0 0.0
  %343 = vmatpush1.msra.mxu0 0.0
  %344 = vmatprep.subr.mxu0 0.0
  %345 = vmatpush1.msra.mxu0 0.0
  %346 = vmatprep.subr.mxu0 0.0
  %347 = vmatpush1.msra.mxu0 0.0
  %348 = vmatprep.subr.mxu0 0.0
  %349 = vmatpush1.msra.mxu0 0.0
  %350 = vmatprep.subr.mxu0 0.0
  %351 = vmatpush1.msra.mxu0 0.0
  %352 = vmatprep.subr.mxu0 0.0
  %353 = vmatpush1.msra.mxu0 0.0
  %354 = vmatprep.subr.mxu0 0.0
  %355 = vmatpush1.msra.mxu0 0.0
  %356 = vmatprep.subr.mxu0 0.0
  %357 = vmatpush1.msra.mxu0 0.0
  %358 = vmatprep.mubr.f32.mxu0 0.0
  %359 = vmatmul.mubr.f32.gmra.mrb[0].mxu0 %v103
  %v360 = vpop.f32.mrb[0].mxu0
  %v361 = vadd.f32 %v99, %v360
  %v362 = vpop.f32.mrb[0].mxu0
  %363 = vmatprep.mubr.f32.mxu0 0.0
  %364 = vmatmul.mubr.f32.gmra.mrb[0].mxu0 %v106
  %v365 = vpop.f32.mrb[0].mxu0
  %v366 = vadd.f32 %v99, %v365
  %v367 = vpop.f32.mrb[0].mxu0
  %368 = vmatprep.mubr.f32.mxu0 0.0
  %369 = vmatmul.mubr.f32.gmra.mrb[0].mxu0 %v109
  %v370 = vpop.f32.mrb[0].mxu0
  %v371 = vadd.f32 %v99, %v370
  %v372 = vpop.f32.mrb[0].mxu0
  %373 = vmatprep.mubr.f32.mxu0 0.0
  %374 = vmatmul.mubr.f32.gmra.mrb[0].mxu0 %v112
  %v375 = vpop.f32.mrb[0].mxu0
  %v376 = vadd.f32 %v99, %v375
  %v377 = vpop.f32.mrb[0].mxu0
  %378 = vmatprep.mubr.f32.mxu0 0.0
  %379 = vmatmul.mubr.f32.gmra.mrb[0].mxu0 %v115
  %v380 = vpop.f32.mrb[0].mxu0
  %v381 = vadd.f32 %v99, %v380
  %v382 = vpop.f32.mrb[0].mxu0
  %383 = vmatprep.mubr.f32.mxu0 0.0
  %384 = vmatmul.mubr.f32.gmra.mrb[0].mxu0 %v118
  %v385 = vpop.f32.mrb[0].mxu0
  %v386 = vadd.f32 %v99, %v385
  %v387 = vpop.f32.mrb[0].mxu0
  %388 = vmatprep.mubr.f32.mxu0 0.0
  %389 = vmatmul.mubr.f32.gmra.mrb[0].mxu0 %v121
  %v390 = vpop.f32.mrb[0].mxu0
  %v391 = vadd.f32 %v99, %v390
  %v392 = vpop.f32.mrb[0].mxu0
  %393 = vmatprep.mubr.f32.mxu0 0.0
  %394 = vmatmul.mubr.f32.gmra.mrb[0].mxu0 %v124
  %v395 = vpop.f32.mrb[0].mxu0
  %v396 = vadd.f32 %v99, %v395
  %v397 = vpop.f32.mrb[0].mxu0
  %398 = vmatprep.mubr.f32.mxu0 0.0
  %399 = vmatmul.mubr.f32.gmra.mrb[0].mxu0 %v127
  %v400 = vpop.f32.mrb[0].mxu0
  %v401 = vadd.f32 %v99, %v400
  %v402 = vpop.f32.mrb[0].mxu0
  %403 = vmatprep.mubr.f32.mxu0 0.0
  %404 = vmatmul.mubr.f32.gmra.mrb[0].mxu0 %v130
  %v405 = vpop.f32.mrb[0].mxu0
  %v406 = vadd.f32 %v99, %v405
  %v407 = vpop.f32.mrb[0].mxu0
  %408 = vmatprep.mubr.f32.mxu0 0.0
  %409 = vmatmul.mubr.f32.gmra.mrb[0].mxu0 %v133
  %v410 = vpop.f32.mrb[0].mxu0
  %v411 = vadd.f32 %v99, %v410
  %v412 = vpop.f32.mrb[0].mxu0
  %413 = vmatprep.mubr.f32.mxu0 0.0
  %414 = vmatmul.mubr.f32.gmra.mrb[0].mxu0 %v136
  %v415 = vpop.f32.mrb[0].mxu0
  %v416 = vadd.f32 %v99, %v415
  %v417 = vpop.f32.mrb[0].mxu0
  %418 = vmatprep.mubr.f32.mxu0 0.0
  %419 = vmatmul.mubr.f32.gmra.mrb[0].mxu0 %v139
  %v420 = vpop.f32.mrb[0].mxu0
  %v421 = vadd.f32 %v99, %v420
  %v422 = vpop.f32.mrb[0].mxu0
  %423 = vmatprep.mubr.f32.mxu0 0.0
  %424 = vmatmul.mubr.f32.gmra.mrb[0].mxu0 %v142
  %v425 = vpop.f32.mrb[0].mxu0
  %v426 = vadd.f32 %v99, %v425
  %v427 = vpop.f32.mrb[0].mxu0
  %428 = vmatprep.mubr.f32.mxu0 0.0
  %429 = vmatmul.mubr.f32.gmra.mrb[0].mxu0 %v145
  %v430 = vpop.f32.mrb[0].mxu0
  %v431 = vadd.f32 %v99, %v430
  %v432 = vpop.f32.mrb[0].mxu0
  %433 = vmatprep.mubr.f32.mxu0 0.0
  %434 = vmatmul.mubr.f32.gmra.mrb[0].mxu0 %v148
  %v435 = vpop.f32.mrb[0].mxu0
  %v436 = vadd.f32 %v99, %v435
  %v437 = vpop.f32.mrb[0].mxu0
  %438 = vmatprep.mubr.f32.mxu0 0.0
  %439 = vmatmul.mubr.f32.gmra.mrb[0].mxu0 %v151
  %v440 = vpop.f32.mrb[0].mxu0
  %v441 = vadd.f32 %v99, %v440
  %v442 = vpop.f32.mrb[0].mxu0
  %443 = vmatprep.mubr.f32.mxu0 0.0
  %444 = vmatmul.mubr.f32.gmra.mrb[0].mxu0 %v154
  %v445 = vpop.f32.mrb[0].mxu0
  %v446 = vadd.f32 %v99, %v445
  %v447 = vpop.f32.mrb[0].mxu0
  %448 = vmatprep.mubr.f32.mxu0 0.0
  %449 = vmatmul.mubr.f32.gmra.mrb[0].mxu0 %v157
  %v450 = vpop.f32.mrb[0].mxu0
  %v451 = vadd.f32 %v99, %v450
  %v452 = vpop.f32.mrb[0].mxu0
  %453 = vmatprep.mubr.f32.mxu0 0.0
  %454 = vmatmul.mubr.f32.gmra.mrb[0].mxu0 %v160
  %v455 = vpop.f32.mrb[0].mxu0
  %v456 = vadd.f32 %v99, %v455
  %v457 = vpop.f32.mrb[0].mxu0
  %458 = vmatprep.mubr.f32.mxu0 0.0
  %459 = vmatmul.mubr.f32.gmra.mrb[0].mxu0 %v163
  %v460 = vpop.f32.mrb[0].mxu0
  %v461 = vadd.f32 %v99, %v460
  %v462 = vpop.f32.mrb[0].mxu0
  %463 = vmatprep.mubr.f32.mxu0 0.0
  %464 = vmatmul.mubr.f32.gmra.mrb[0].mxu0 %v166
  %v465 = vpop.f32.mrb[0].mxu0
  %v466 = vadd.f32 %v99, %v465
  %v467 = vpop.f32.mrb[0].mxu0
  %468 = vmatprep.mubr.f32.mxu0 0.0
  %469 = vmatmul.mubr.f32.gmra.mrb[0].mxu0 %v169
  %v470 = vpop.f32.mrb[0].mxu0
  %v471 = vadd.f32 %v99, %v470
  %v472 = vpop.f32.mrb[0].mxu0
  %473 = vmatprep.mubr.f32.mxu0 0.0
  %474 = vmatmul.mubr.f32.gmra.mrb[0].mxu0 %v172
  %v475 = vpop.f32.mrb[0].mxu0
  %v476 = vadd.f32 %v99, %v475
  %v477 = vpop.f32.mrb[0].mxu0
  %478 = vmatprep.mubr.f32.mxu0 0.0
  %479 = vmatmul.mubr.f32.gmra.mrb[0].mxu0 %v175
  %v480 = vpop.f32.mrb[0].mxu0
  %v481 = vadd.f32 %v99, %v480
  %v482 = vpop.f32.mrb[0].mxu0
  %483 = vmatprep.mubr.f32.mxu0 0.0
  %484 = vmatmul.mubr.f32.gmra.mrb[0].mxu0 %v178
  %v485 = vpop.f32.mrb[0].mxu0
  %v486 = vadd.f32 %v99, %v485
  %v487 = vpop.f32.mrb[0].mxu0
  %488 = vmatprep.mubr.f32.mxu0 0.0
  %489 = vmatmul.mubr.f32.gmra.mrb[0].mxu0 %v181
  %v490 = vpop.f32.mrb[0].mxu0
  %v491 = vadd.f32 %v99, %v490
  %v492 = vpop.f32.mrb[0].mxu0
  %493 = vmatprep.mubr.f32.mxu0 0.0
  %494 = vmatmul.mubr.f32.gmra.mrb[0].mxu0 %v184
  %v495 = vpop.f32.mrb[0].mxu0
  %v496 = vadd.f32 %v99, %v495
  %v497 = vpop.f32.mrb[0].mxu0
  %498 = vmatprep.mubr.f32.mxu0 0.0
  %499 = vmatmul.mubr.f32.gmra.mrb[0].mxu0 %v187
  %v500 = vpop.f32.mrb[0].mxu0
  %v501 = vadd.f32 %v99, %v500
  %v502 = vpop.f32.mrb[0].mxu0
  %503 = vmatprep.mubr.f32.mxu0 0.0
  %504 = vmatmul.mubr.f32.gmra.mrb[0].mxu0 %v190
  %v505 = vpop.f32.mrb[0].mxu0
  %v506 = vadd.f32 %v99, %v505
  %v507 = vpop.f32.mrb[0].mxu0
  %508 = vmatprep.mubr.f32.mxu0 0.0
  %509 = vmatmul.mubr.f32.gmra.mrb[0].mxu0 %v193
  %v510 = vpop.f32.mrb[0].mxu0
  %v511 = vadd.f32 %v99, %v510
  %v512 = vpop.f32.mrb[0].mxu0
  %513 = vmatprep.mubr.f32.mxu0 0.0
  %514 = vmatmul.mubr.f32.gmra.mrb[0].mxu0 %v196
  %v515 = vpop.f32.mrb[0].mxu0
  %v516 = vadd.f32 %v99, %v515
  %v517 = vpop.f32.mrb[0].mxu0
  %518 = vmatprep.mubr.f32.mxu0 0.0
  %519 = vmatmul.mubr.f32.gmra.mrb[0].mxu0 %v199
  %v520 = vpop.f32.mrb[0].mxu0
  %v521 = vadd.f32 %v99, %v520
  %v522 = vpop.f32.mrb[0].mxu0
  %523 = vmatprep.mubr.f32.mxu0 0.0
  %524 = vmatmul.mubr.f32.gmra.mrb[0].mxu0 %v202
  %v525 = vpop.f32.mrb[0].mxu0
  %v526 = vadd.f32 %v99, %v525
  %v527 = vpop.f32.mrb[0].mxu0
  %528 = vmatprep.mubr.f32.mxu0 0.0
  %529 = vmatmul.mubr.f32.gmra.mrb[0].mxu0 %v205
  %v530 = vpop.f32.mrb[0].mxu0
  %v531 = vadd.f32 %v99, %v530
  %v532 = vpop.f32.mrb[0].mxu0
  %533 = vmatprep.mubr.f32.mxu0 0.0
  %534 = vmatmul.mubr.f32.gmra.mrb[0].mxu0 %v208
  %v535 = vpop.f32.mrb[0].mxu0
  %v536 = vadd.f32 %v99, %v535
  %v537 = vpop.f32.mrb[0].mxu0
  %538 = vmatprep.mubr.f32.mxu0 0.0
  %539 = vmatmul.mubr.f32.gmra.mrb[0].mxu0 %v211
  %v540 = vpop.f32.mrb[0].mxu0
  %v541 = vadd.f32 %v99, %v540
  %v542 = vpop.f32.mrb[0].mxu0
  %543 = vmatprep.mubr.f32.mxu0 0.0
  %544 = vmatmul.mubr.f32.gmra.mrb[0].mxu0 %v214
  %v545 = vpop.f32.mrb[0].mxu0
  %v546 = vadd.f32 %v99, %v545
  %v547 = vpop.f32.mrb[0].mxu0
  %548 = vmatprep.mubr.f32.mxu0 0.0
  %549 = vmatmul.mubr.f32.gmra.mrb[0].mxu0 %v217
  %v550 = vpop.f32.mrb[0].mxu0
  %v551 = vadd.f32 %v99, %v550
  %v552 = vpop.f32.mrb[0].mxu0
  %553 = vmatprep.mubr.f32.mxu0 0.0
  %554 = vmatmul.mubr.f32.gmra.mrb[0].mxu0 %v220
  %v555 = vpop.f32.mrb[0].mxu0
  %v556 = vadd.f32 %v99, %v555
  %v557 = vpop.f32.mrb[0].mxu0
  %558 = vmatprep.mubr.f32.mxu0 0.0
  %559 = vmatmul.mubr.f32.gmra.mrb[0].mxu0 %v223
  %v560 = vpop.f32.mrb[0].mxu0
  %v561 = vadd.f32 %v99, %v560
  %v562 = vpop.f32.mrb[0].mxu0
  %563 = vmatprep.mubr.f32.mxu0 0.0
  %564 = vmatmul.mubr.f32.gmra.mrb[0].mxu0 %v226
  %v565 = vpop.f32.mrb[0].mxu0
  %v566 = vadd.f32 %v99, %v565
  %v567 = vpop.f32.mrb[0].mxu0
  %568 = vmatprep.mubr.f32.mxu0 0.0
  %569 = vmatmul.mubr.f32.gmra.mrb[0].mxu0 %v229
  %v570 = vpop.f32.mrb[0].mxu0
  %v571 = vadd.f32 %v99, %v570
  %v572 = vpop.f32.mrb[0].mxu0
  %573 = vmatprep.mubr.f32.mxu0 0.0
  %574 = vmatmul.mubr.f32.gmra.mrb[0].mxu0 %v232
  %v575 = vpop.f32.mrb[0].mxu0
  %v576 = vadd.f32 %v99, %v575
  %v577 = vpop.f32.mrb[0].mxu0
  %578 = vmatprep.mubr.f32.mxu0 0.0
  %579 = vmatmul.mubr.f32.gmra.mrb[0].mxu0 %v235
  %v580 = vpop.f32.mrb[0].mxu0
  %v581 = vadd.f32 %v99, %v580
  %v582 = vpop.f32.mrb[0].mxu0
  %583 = vmatprep.mubr.f32.mxu0 0.0
  %584 = vmatmul.mubr.f32.gmra.mrb[0].mxu0 %v238
  %v585 = vpop.f32.mrb[0].mxu0
  %v586 = vadd.f32 %v99, %v585
  %v587 = vpop.f32.mrb[0].mxu0
  %588 = vmatprep.mubr.f32.mxu0 0.0
  %589 = vmatmul.mubr.f32.gmra.mrb[0].mxu0 %v241
  %v590 = vpop.f32.mrb[0].mxu0
  %v591 = vadd.f32 %v99, %v590
  %v592 = vpop.f32.mrb[0].mxu0
  %593 = vmatprep.mubr.f32.mxu0 0.0
  %594 = vmatmul.mubr.f32.gmra.mrb[0].mxu0 %v244
  %v595 = vpop.f32.mrb[0].mxu0
  %v596 = vadd.f32 %v99, %v595
  %v597 = vpop.f32.mrb[0].mxu0
  %598 = vmatprep.mubr.f32.mxu0 0.0
  %599 = vmatmul.mubr.f32.gmra.mrb[0].mxu0 %v247
  %v600 = vpop.f32.mrb[0].mxu0
  %v601 = vadd.f32 %v99, %v600
  %v602 = vpop.f32.mrb[0].mxu0
  %603 = vmatprep.mubr.f32.mxu0 0.0
  %604 = vmatmul.mubr.f32.gmra.mrb[0].mxu0 %v250
  %v605 = vpop.f32.mrb[0].mxu0
  %v606 = vadd.f32 %v99, %v605
  %v607 = vpop.f32.mrb[0].mxu0
  %608 = vmatprep.mubr.f32.mxu0 0.0
  %609 = vmatmul.mubr.f32.gmra.mrb[0].mxu0 %v253
  %v610 = vpop.f32.mrb[0].mxu0
  %v611 = vadd.f32 %v99, %v610
  %v612 = vpop.f32.mrb[0].mxu0
  %613 = vmatprep.mubr.f32.mxu0 0.0
  %614 = vmatmul.mubr.f32.gmra.mrb[0].mxu0 %v256
  %v615 = vpop.f32.mrb[0].mxu0
  %v616 = vadd.f32 %v99, %v615
  %v617 = vpop.f32.mrb[0].mxu0
  %618 = vmatprep.mubr.f32.mxu0 0.0
  %619 = vmatmul.mubr.f32.gmra.mrb[0].mxu0 %v259
  %v620 = vpop.f32.mrb[0].mxu0
  %v621 = vadd.f32 %v99, %v620
  %v622 = vpop.f32.mrb[0].mxu0
  %623 = vmatprep.mubr.f32.mxu0 0.0
  %624 = vmatmul.mubr.f32.gmra.mrb[0].mxu0 %v262
  %v625 = vpop.f32.mrb[0].mxu0
  %v626 = vadd.f32 %v99, %v625
  %v627 = vpop.f32.mrb[0].mxu0
  %628 = vmatprep.mubr.f32.mxu0 0.0
  %629 = vmatmul.mubr.f32.gmra.mrb[0].mxu0 %v265
  %v630 = vpop.f32.mrb[0].mxu0
  %v631 = vadd.f32 %v99, %v630
  %v632 = vpop.f32.mrb[0].mxu0
  %633 = vmatprep.mubr.f32.mxu0 0.0
  %634 = vmatmul.mubr.f32.gmra.mrb[0].mxu0 %v268
  %v635 = vpop.f32.mrb[0].mxu0
  %v636 = vadd.f32 %v99, %v635
  %v637 = vpop.f32.mrb[0].mxu0
  %638 = vmatprep.mubr.f32.mxu0 0.0
  %639 = vmatmul.mubr.f32.gmra.mrb[0].mxu0 %v271
  %v640 = vpop.f32.mrb[0].mxu0
  %v641 = vadd.f32 %v99, %v640
  %v642 = vpop.f32.mrb[0].mxu0
  %643 = vmatprep.mubr.f32.mxu0 0.0
  %644 = vmatmul.mubr.f32.gmra.mrb[0].mxu0 %v274
  %v645 = vpop.f32.mrb[0].mxu0
  %v646 = vadd.f32 %v99, %v645
  %v647 = vpop.f32.mrb[0].mxu0
  %648 = vmatprep.mubr.f32.mxu0 0.0
  %649 = vmatmul.mubr.f32.gmra.mrb[0].mxu0 %v277
  %v650 = vpop.f32.mrb[0].mxu0
  %v651 = vadd.f32 %v99, %v650
  %v652 = vpop.f32.mrb[0].mxu0
  %653 = vmatprep.mubr.f32.mxu0 0.0
  %654 = vmatmul.mubr.f32.gmra.mrb[0].mxu0 %v280
  %v655 = vpop.f32.mrb[0].mxu0
  %v656 = vadd.f32 %v99, %v655
  %v657 = vpop.f32.mrb[0].mxu0
  %658 = vmatprep.mubr.f32.mxu0 0.0
  %659 = vmatmul.mubr.f32.gmra.mrb[0].mxu0 %v283
  %v660 = vpop.f32.mrb[0].mxu0
  %v661 = vadd.f32 %v99, %v660
  %v662 = vpop.f32.mrb[0].mxu0
  %663 = vmatprep.mubr.f32.mxu0 0.0
  %664 = vmatmul.mubr.f32.gmra.mrb[0].mxu0 %v286
  %v665 = vpop.f32.mrb[0].mxu0
  %v666 = vadd.f32 %v99, %v665
  %v667 = vpop.f32.mrb[0].mxu0
  %668 = vmatprep.mubr.f32.mxu0 0.0
  %669 = vmatmul.mubr.f32.gmra.mrb[0].mxu0 %v289
  %v670 = vpop.f32.mrb[0].mxu0
  %v671 = vadd.f32 %v99, %v670
  %v672 = vpop.f32.mrb[0].mxu0
  %673 = vmatprep.mubr.f32.mxu0 0.0
  %674 = vmatmul.mubr.f32.gmra.mrb[0].mxu0 %v292
  %v675 = vpop.f32.mrb[0].mxu0
  %v676 = vadd.f32 %v99, %v675
  %v677 = vpop.f32.mrb[0].mxu0
  %678 = vdwg.mxu0
  %v679 = vmax.f32 %v361, 0.0
  %v680 = vmax.f32 %v366, 0.0
  %v681 = vmax.f32 %v371, 0.0
  %v682 = vmax.f32 %v376, 0.0
  %v683 = vmax.f32 %v381, 0.0
  %v684 = vmax.f32 %v386, 0.0
  %v685 = vmax.f32 %v391, 0.0
  %v686 = vmax.f32 %v396, 0.0
  %v687 = vmax.f32 %v401, 0.0
  %v688 = vmax.f32 %v406, 0.0
  %v689 = vmax.f32 %v411, 0.0
  %v690 = vmax.f32 %v416, 0.0
  %v691 = vmax.f32 %v421, 0.0
  %v692 = vmax.f32 %v426, 0.0
  %v693 = vmax.f32 %v431, 0.0
  %v694 = vmax.f32 %v436, 0.0
  %v695 = vmax.f32 %v441, 0.0
  %v696 = vmax.f32 %v446, 0.0
  %v697 = vmax.f32 %v451, 0.0
  %v698 = vmax.f32 %v456, 0.0
  %v699 = vmax.f32 %v461, 0.0
  %v700 = vmax.f32 %v466, 0.0
  %v701 = vmax.f32 %v471, 0.0
  %v702 = vmax.f32 %v476, 0.0
  %v703 = vmax.f32 %v481, 0.0
  %v704 = vmax.f32 %v486, 0.0
  %v705 = vmax.f32 %v491, 0.0
  %v706 = vmax.f32 %v496, 0.0
  %v707 = vmax.f32 %v501, 0.0
  %v708 = vmax.f32 %v506, 0.0
  %v709 = vmax.f32 %v511, 0.0
  %v710 = vmax.f32 %v516, 0.0
  %v711 = vmax.f32 %v521, 0.0
  %v712 = vmax.f32 %v526, 0.0
  %v713 = vmax.f32 %v531, 0.0
  %v714 = vmax.f32 %v536, 0.0
  %v715 = vmax.f32 %v541, 0.0
  %v716 = vmax.f32 %v546, 0.0
  %v717 = vmax.f32 %v551, 0.0
  %v718 = vmax.f32 %v556, 0.0
  %v719 = vmax.f32 %v561, 0.0
  %v720 = vmax.f32 %v566, 0.0
  %v721 = vmax.f32 %v571, 0.0
  %v722 = vmax.f32 %v576, 0.0
  %v723 = vmax.f32 %v581, 0.0
  %v724 = vmax.f32 %v586, 0.0
  %v725 = vmax.f32 %v591, 0.0
  %v726 = vmax.f32 %v596, 0.0
  %v727 = vmax.f32 %v601, 0.0
  %v728 = vmax.f32 %v606, 0.0
  %v729 = vmax.f32 %v611, 0.0
  %v730 = vmax.f32 %v616, 0.0
  %v731 = vmax.f32 %v621, 0.0
  %v732 = vmax.f32 %v626, 0.0
  %v733 = vmax.f32 %v631, 0.0
  %v734 = vmax.f32 %v636, 0.0
  %v735 = vmax.f32 %v641, 0.0
  %v736 = vmax.f32 %v646, 0.0
  %v737 = vmax.f32 %v651, 0.0
  %v738 = vmax.f32 %v656, 0.0
  %v739 = vmax.f32 %v661, 0.0
  %v740 = vmax.f32 %v666, 0.0
  %v741 = vmax.f32 %v671, 0.0
  %v742 = vmax.f32 %v676, 0.0
  %v743 = vld [vmem:[%s3] sm:$0xff]
  %v744 = vld [vmem:[%s3 + $0x8] sm:$0xff]
  %v745 = vld [vmem:[%s3 + $0x10] sm:$0xff]
  %v746 = vld [vmem:[%s3 + $0x18] sm:$0xff]
  %v747 = vld [vmem:[%s3 + $0x20] sm:$0xff]
  %v748 = vld [vmem:[%s3 + $0x28] sm:$0xff]
  %v749 = vld [vmem:[%s3 + $0x30] sm:$0xff]
  %v750 = vld [vmem:[%s3 + $0x38] sm:$0xff]
  %v751 = vld [vmem:[%s3 + $0x40] sm:$0xff]
  %v752 = vld [vmem:[%s3 + $0x48] sm:$0xff]
  %v753 = vld [vmem:[%s3 + $0x50] sm:$0xff]
  %v754 = vld [vmem:[%s3 + $0x58] sm:$0xff]
  %v755 = vld [vmem:[%s3 + $0x60] sm:$0xff]
  %v756 = vld [vmem:[%s3 + $0x68] sm:$0xff]
  %v757 = vld [vmem:[%s3 + $0x70] sm:$0xff]
  %v758 = vld [vmem:[%s3 + $0x78] sm:$0xff]
  %v759 = vld [vmem:[%s4] sm:$0x1]
  %v761 = vlaneseq
  %v762 = vshrl.u32 %v761, 7
  %v763 = vsub.s32 0, %v762
  %v764 = vrot.slane %v759, %v763
  %766 = vmatprep.subr.mxu0 0.0
  %767 = vmatpush1.msra.mxu0 %v743
  %768 = vmatprep.subr.mxu0 0.0
  %769 = vmatpush1.msra.mxu0 %v744
  %770 = vmatprep.subr.mxu0 0.0
  %771 = vmatpush1.msra.mxu0 %v745
  %772 = vmatprep.subr.mxu0 0.0
  %773 = vmatpush1.msra.mxu0 %v746
  %774 = vmatprep.subr.mxu0 0.0
  %775 = vmatpush1.msra.mxu0 %v747
  %776 = vmatprep.subr.mxu0 0.0
  %777 = vmatpush1.msra.mxu0 %v748
  %778 = vmatprep.subr.mxu0 0.0
  %779 = vmatpush1.msra.mxu0 %v749
  %780 = vmatprep.subr.mxu0 0.0
  %781 = vmatpush1.msra.mxu0 %v750
  %782 = vmatprep.subr.mxu0 0.0
  %783 = vmatpush1.msra.mxu0 %v751
  %784 = vmatprep.subr.mxu0 0.0
  %785 = vmatpush1.msra.mxu0 %v752
  %786 = vmatprep.subr.mxu0 0.0
  %787 = vmatpush1.msra.mxu0 %v753
  %788 = vmatprep.subr.mxu0 0.0
  %789 = vmatpush1.msra.mxu0 %v754
  %790 = vmatprep.subr.mxu0 0.0
  %791 = vmatpush1.msra.mxu0 %v755
  %792 = vmatprep.subr.mxu0 0.0
  %793 = vmatpush1.msra.mxu0 %v756
  %794 = vmatprep.subr.mxu0 0.0
  %795 = vmatpush1.msra.mxu0 %v757
  %796 = vmatprep.subr.mxu0 0.0
  %797 = vmatpush1.msra.mxu0 %v758
  %798 = vmatprep.subr.mxu0 0.0
  %799 = vmatpush1.msra.mxu0 0.0
  %800 = vmatprep.subr.mxu0 0.0
  %801 = vmatpush1.msra.mxu0 0.0
  %802 = vmatprep.subr.mxu0 0.0
  %803 = vmatpush1.msra.mxu0 0.0
  %804 = vmatprep.subr.mxu0 0.0
  %805 = vmatpush1.msra.mxu0 0.0
  %806 = vmatprep.subr.mxu0 0.0
  %807 = vmatpush1.msra.mxu0 0.0
  %808 = vmatprep.subr.mxu0 0.0
  %809 = vmatpush1.msra.mxu0 0.0
  %810 = vmatprep.subr.mxu0 0.0
  %811 = vmatpush1.msra.mxu0 0.0
  %812 = vmatprep.subr.mxu0 0.0
  %813 = vmatpush1.msra.mxu0 0.0
  %814 = vmatprep.subr.mxu0 0.0
  %815 = vmatpush1.msra.mxu0 0.0
  %816 = vmatprep.subr.mxu0 0.0
  %817 = vmatpush1.msra.mxu0 0.0
  %818 = vmatprep.subr.mxu0 0.0
  %819 = vmatpush1.msra.mxu0 0.0
  %820 = vmatprep.subr.mxu0 0.0
  %821 = vmatpush1.msra.mxu0 0.0
  %822 = vmatprep.subr.mxu0 0.0
  %823 = vmatpush1.msra.mxu0 0.0
  %824 = vmatprep.subr.mxu0 0.0
  %825 = vmatpush1.msra.mxu0 0.0
  %826 = vmatprep.subr.mxu0 0.0
  %827 = vmatpush1.msra.mxu0 0.0
  %828 = vmatprep.subr.mxu0 0.0
  %829 = vmatpush1.msra.mxu0 0.0
  %830 = vmatprep.mubr.f32.mxu0 0.0
  %831 = vmatmul.mubr.f32.gmra.mrb[0].mxu0 %v679
  %v832 = vpop.f32.mrb[0].mxu0
  %v833 = vadd.f32 %v764, %v832
  %v834 = vpop.f32.mrb[0].mxu0
  %835 = vmatprep.mubr.f32.mxu0 0.0
  %836 = vmatmul.mubr.f32.gmra.mrb[0].mxu0 %v680
  %v837 = vpop.f32.mrb[0].mxu0
  %v838 = vadd.f32 %v764, %v837
  %v839 = vpop.f32.mrb[0].mxu0
  %840 = vmatprep.mubr.f32.mxu0 0.0
  %841 = vmatmul.mubr.f32.gmra.mrb[0].mxu0 %v681
  %v842 = vpop.f32.mrb[0].mxu0
  %v843 = vadd.f32 %v764, %v842
  %v844 = vpop.f32.mrb[0].mxu0
  %845 = vmatprep.mubr.f32.mxu0 0.0
  %846 = vmatmul.mubr.f32.gmra.mrb[0].mxu0 %v682
  %v847 = vpop.f32.mrb[0].mxu0
  %v848 = vadd.f32 %v764, %v847
  %v849 = vpop.f32.mrb[0].mxu0
  %850 = vmatprep.mubr.f32.mxu0 0.0
  %851 = vmatmul.mubr.f32.gmra.mrb[0].mxu0 %v683
  %v852 = vpop.f32.mrb[0].mxu0
  %v853 = vadd.f32 %v764, %v852
  %v854 = vpop.f32.mrb[0].mxu0
  %855 = vmatprep.mubr.f32.mxu0 0.0
  %856 = vmatmul.mubr.f32.gmra.mrb[0].mxu0 %v684
  %v857 = vpop.f32.mrb[0].mxu0
  %v858 = vadd.f32 %v764, %v857
  %v859 = vpop.f32.mrb[0].mxu0
  %860 = vmatprep.mubr.f32.mxu0 0.0
  %861 = vmatmul.mubr.f32.gmra.mrb[0].mxu0 %v685
  %v862 = vpop.f32.mrb[0].mxu0
  %v863 = vadd.f32 %v764, %v862
  %v864 = vpop.f32.mrb[0].mxu0
  %865 = vmatprep.mubr.f32.mxu0 0.0
  %866 = vmatmul.mubr.f32.gmra.mrb[0].mxu0 %v686
  %v867 = vpop.f32.mrb[0].mxu0
  %v868 = vadd.f32 %v764, %v867
  %v869 = vpop.f32.mrb[0].mxu0
  %870 = vmatprep.mubr.f32.mxu0 0.0
  %871 = vmatmul.mubr.f32.gmra.mrb[0].mxu0 %v687
  %v872 = vpop.f32.mrb[0].mxu0
  %v873 = vadd.f32 %v764, %v872
  %v874 = vpop.f32.mrb[0].mxu0
  %875 = vmatprep.mubr.f32.mxu0 0.0
  %876 = vmatmul.mubr.f32.gmra.mrb[0].mxu0 %v688
  %v877 = vpop.f32.mrb[0].mxu0
  %v878 = vadd.f32 %v764, %v877
  %v879 = vpop.f32.mrb[0].mxu0
  %880 = vmatprep.mubr.f32.mxu0 0.0
  %881 = vmatmul.mubr.f32.gmra.mrb[0].mxu0 %v689
  %v882 = vpop.f32.mrb[0].mxu0
  %v883 = vadd.f32 %v764, %v882
  %v884 = vpop.f32.mrb[0].mxu0
  %885 = vmatprep.mubr.f32.mxu0 0.0
  %886 = vmatmul.mubr.f32.gmra.mrb[0].mxu0 %v690
  %v887 = vpop.f32.mrb[0].mxu0
  %v888 = vadd.f32 %v764, %v887
  %v889 = vpop.f32.mrb[0].mxu0
  %890 = vmatprep.mubr.f32.mxu0 0.0
  %891 = vmatmul.mubr.f32.gmra.mrb[0].mxu0 %v691
  %v892 = vpop.f32.mrb[0].mxu0
  %v893 = vadd.f32 %v764, %v892
  %v894 = vpop.f32.mrb[0].mxu0
  %895 = vmatprep.mubr.f32.mxu0 0.0
  %896 = vmatmul.mubr.f32.gmra.mrb[0].mxu0 %v692
  %v897 = vpop.f32.mrb[0].mxu0
  %v898 = vadd.f32 %v764, %v897
  %v899 = vpop.f32.mrb[0].mxu0
  %900 = vmatprep.mubr.f32.mxu0 0.0
  %901 = vmatmul.mubr.f32.gmra.mrb[0].mxu0 %v693
  %v902 = vpop.f32.mrb[0].mxu0
  %v903 = vadd.f32 %v764, %v902
  %v904 = vpop.f32.mrb[0].mxu0
  %905 = vmatprep.mubr.f32.mxu0 0.0
  %906 = vmatmul.mubr.f32.gmra.mrb[0].mxu0 %v694
  %v907 = vpop.f32.mrb[0].mxu0
  %v908 = vadd.f32 %v764, %v907
  %v909 = vpop.f32.mrb[0].mxu0
  %910 = vmatprep.mubr.f32.mxu0 0.0
  %911 = vmatmul.mubr.f32.gmra.mrb[0].mxu0 %v695
  %v912 = vpop.f32.mrb[0].mxu0
  %v913 = vadd.f32 %v764, %v912
  %v914 = vpop.f32.mrb[0].mxu0
  %915 = vmatprep.mubr.f32.mxu0 0.0
  %916 = vmatmul.mubr.f32.gmra.mrb[0].mxu0 %v696
  %v917 = vpop.f32.mrb[0].mxu0
  %v918 = vadd.f32 %v764, %v917
  %v919 = vpop.f32.mrb[0].mxu0
  %920 = vmatprep.mubr.f32.mxu0 0.0
  %921 = vmatmul.mubr.f32.gmra.mrb[0].mxu0 %v697
  %v922 = vpop.f32.mrb[0].mxu0
  %v923 = vadd.f32 %v764, %v922
  %v924 = vpop.f32.mrb[0].mxu0
  %925 = vmatprep.mubr.f32.mxu0 0.0
  %926 = vmatmul.mubr.f32.gmra.mrb[0].mxu0 %v698
  %v927 = vpop.f32.mrb[0].mxu0
  %v928 = vadd.f32 %v764, %v927
  %v929 = vpop.f32.mrb[0].mxu0
  %930 = vmatprep.mubr.f32.mxu0 0.0
  %931 = vmatmul.mubr.f32.gmra.mrb[0].mxu0 %v699
  %v932 = vpop.f32.mrb[0].mxu0
  %v933 = vadd.f32 %v764, %v932
  %v934 = vpop.f32.mrb[0].mxu0
  %935 = vmatprep.mubr.f32.mxu0 0.0
  %936 = vmatmul.mubr.f32.gmra.mrb[0].mxu0 %v700
  %v937 = vpop.f32.mrb[0].mxu0
  %v938 = vadd.f32 %v764, %v937
  %v939 = vpop.f32.mrb[0].mxu0
  %940 = vmatprep.mubr.f32.mxu0 0.0
  %941 = vmatmul.mubr.f32.gmra.mrb[0].mxu0 %v701
  %v942 = vpop.f32.mrb[0].mxu0
  %v943 = vadd.f32 %v764, %v942
  %v944 = vpop.f32.mrb[0].mxu0
  %945 = vmatprep.mubr.f32.mxu0 0.0
  %946 = vmatmul.mubr.f32.gmra.mrb[0].mxu0 %v702
  %v947 = vpop.f32.mrb[0].mxu0
  %v948 = vadd.f32 %v764, %v947
  %v949 = vpop.f32.mrb[0].mxu0
  %950 = vmatprep.mubr.f32.mxu0 0.0
  %951 = vmatmul.mubr.f32.gmra.mrb[0].mxu0 %v703
  %v952 = vpop.f32.mrb[0].mxu0
  %v953 = vadd.f32 %v764, %v952
  %v954 = vpop.f32.mrb[0].mxu0
  %955 = vmatprep.mubr.f32.mxu0 0.0
  %956 = vmatmul.mubr.f32.gmra.mrb[0].mxu0 %v704
  %v957 = vpop.f32.mrb[0].mxu0
  %v958 = vadd.f32 %v764, %v957
  %v959 = vpop.f32.mrb[0].mxu0
  %960 = vmatprep.mubr.f32.mxu0 0.0
  %961 = vmatmul.mubr.f32.gmra.mrb[0].mxu0 %v705
  %v962 = vpop.f32.mrb[0].mxu0
  %v963 = vadd.f32 %v764, %v962
  %v964 = vpop.f32.mrb[0].mxu0
  %965 = vmatprep.mubr.f32.mxu0 0.0
  %966 = vmatmul.mubr.f32.gmra.mrb[0].mxu0 %v706
  %v967 = vpop.f32.mrb[0].mxu0
  %v968 = vadd.f32 %v764, %v967
  %v969 = vpop.f32.mrb[0].mxu0
  %970 = vmatprep.mubr.f32.mxu0 0.0
  %971 = vmatmul.mubr.f32.gmra.mrb[0].mxu0 %v707
  %v972 = vpop.f32.mrb[0].mxu0
  %v973 = vadd.f32 %v764, %v972
  %v974 = vpop.f32.mrb[0].mxu0
  %975 = vmatprep.mubr.f32.mxu0 0.0
  %976 = vmatmul.mubr.f32.gmra.mrb[0].mxu0 %v708
  %v977 = vpop.f32.mrb[0].mxu0
  %v978 = vadd.f32 %v764, %v977
  %v979 = vpop.f32.mrb[0].mxu0
  %980 = vmatprep.mubr.f32.mxu0 0.0
  %981 = vmatmul.mubr.f32.gmra.mrb[0].mxu0 %v709
  %v982 = vpop.f32.mrb[0].mxu0
  %v983 = vadd.f32 %v764, %v982
  %v984 = vpop.f32.mrb[0].mxu0
  %985 = vmatprep.mubr.f32.mxu0 0.0
  %986 = vmatmul.mubr.f32.gmra.mrb[0].mxu0 %v710
  %v987 = vpop.f32.mrb[0].mxu0
  %v988 = vadd.f32 %v764, %v987
  %v989 = vpop.f32.mrb[0].mxu0
  %990 = vmatprep.mubr.f32.mxu0 0.0
  %991 = vmatmul.mubr.f32.gmra.mrb[0].mxu0 %v711
  %v992 = vpop.f32.mrb[0].mxu0
  %v993 = vadd.f32 %v764, %v992
  %v994 = vpop.f32.mrb[0].mxu0
  %995 = vmatprep.mubr.f32.mxu0 0.0
  %996 = vmatmul.mubr.f32.gmra.mrb[0].mxu0 %v712
  %v997 = vpop.f32.mrb[0].mxu0
  %v998 = vadd.f32 %v764, %v997
  %v999 = vpop.f32.mrb[0].mxu0
  %1000 = vmatprep.mubr.f32.mxu0 0.0
  %1001 = vmatmul.mubr.f32.gmra.mrb[0].mxu0 %v713
  %v1002 = vpop.f32.mrb[0].mxu0
  %v1003 = vadd.f32 %v764, %v1002
  %v1004 = vpop.f32.mrb[0].mxu0
  %1005 = vmatprep.mubr.f32.mxu0 0.0
  %1006 = vmatmul.mubr.f32.gmra.mrb[0].mxu0 %v714
  %v1007 = vpop.f32.mrb[0].mxu0
  %v1008 = vadd.f32 %v764, %v1007
  %v1009 = vpop.f32.mrb[0].mxu0
  %1010 = vmatprep.mubr.f32.mxu0 0.0
  %1011 = vmatmul.mubr.f32.gmra.mrb[0].mxu0 %v715
  %v1012 = vpop.f32.mrb[0].mxu0
  %v1013 = vadd.f32 %v764, %v1012
  %v1014 = vpop.f32.mrb[0].mxu0
  %1015 = vmatprep.mubr.f32.mxu0 0.0
  %1016 = vmatmul.mubr.f32.gmra.mrb[0].mxu0 %v716
  %v1017 = vpop.f32.mrb[0].mxu0
  %v1018 = vadd.f32 %v764, %v1017
  %v1019 = vpop.f32.mrb[0].mxu0
  %1020 = vmatprep.mubr.f32.mxu0 0.0
  %1021 = vmatmul.mubr.f32.gmra.mrb[0].mxu0 %v717
  %v1022 = vpop.f32.mrb[0].mxu0
  %v1023 = vadd.f32 %v764, %v1022
  %v1024 = vpop.f32.mrb[0].mxu0
  %1025 = vmatprep.mubr.f32.mxu0 0.0
  %1026 = vmatmul.mubr.f32.gmra.mrb[0].mxu0 %v718
  %v1027 = vpop.f32.mrb[0].mxu0
  %v1028 = vadd.f32 %v764, %v1027
  %v1029 = vpop.f32.mrb[0].mxu0
  %1030 = vmatprep.mubr.f32.mxu0 0.0
  %1031 = vmatmul.mubr.f32.gmra.mrb[0].mxu0 %v719
  %v1032 = vpop.f32.mrb[0].mxu0
  %v1033 = vadd.f32 %v764, %v1032
  %v1034 = vpop.f32.mrb[0].mxu0
  %1035 = vmatprep.mubr.f32.mxu0 0.0
  %1036 = vmatmul.mubr.f32.gmra.mrb[0].mxu0 %v720
  %v1037 = vpop.f32.mrb[0].mxu0
  %v1038 = vadd.f32 %v764, %v1037
  %v1039 = vpop.f32.mrb[0].mxu0
  %1040 = vmatprep.mubr.f32.mxu0 0.0
  %1041 = vmatmul.mubr.f32.gmra.mrb[0].mxu0 %v721
  %v1042 = vpop.f32.mrb[0].mxu0
  %v1043 = vadd.f32 %v764, %v1042
  %v1044 = vpop.f32.mrb[0].mxu0
  %1045 = vmatprep.mubr.f32.mxu0 0.0
  %1046 = vmatmul.mubr.f32.gmra.mrb[0].mxu0 %v722
  %v1047 = vpop.f32.mrb[0].mxu0
  %v1048 = vadd.f32 %v764, %v1047
  %v1049 = vpop.f32.mrb[0].mxu0
  %1050 = vmatprep.mubr.f32.mxu0 0.0
  %1051 = vmatmul.mubr.f32.gmra.mrb[0].mxu0 %v723
  %v1052 = vpop.f32.mrb[0].mxu0
  %v1053 = vadd.f32 %v764, %v1052
  %v1054 = vpop.f32.mrb[0].mxu0
  %1055 = vmatprep.mubr.f32.mxu0 0.0
  %1056 = vmatmul.mubr.f32.gmra.mrb[0].mxu0 %v724
  %v1057 = vpop.f32.mrb[0].mxu0
  %v1058 = vadd.f32 %v764, %v1057
  %v1059 = vpop.f32.mrb[0].mxu0
  %1060 = vmatprep.mubr.f32.mxu0 0.0
  %1061 = vmatmul.mubr.f32.gmra.mrb[0].mxu0 %v725
  %v1062 = vpop.f32.mrb[0].mxu0
  %v1063 = vadd.f32 %v764, %v1062
  %v1064 = vpop.f32.mrb[0].mxu0
  %1065 = vmatprep.mubr.f32.mxu0 0.0
  %1066 = vmatmul.mubr.f32.gmra.mrb[0].mxu0 %v726
  %v1067 = vpop.f32.mrb[0].mxu0
  %v1068 = vadd.f32 %v764, %v1067
  %v1069 = vpop.f32.mrb[0].mxu0
  %1070 = vmatprep.mubr.f32.mxu0 0.0
  %1071 = vmatmul.mubr.f32.gmra.mrb[0].mxu0 %v727
  %v1072 = vpop.f32.mrb[0].mxu0
  %v1073 = vadd.f32 %v764, %v1072
  %v1074 = vpop.f32.mrb[0].mxu0
  %1075 = vmatprep.mubr.f32.mxu0 0.0
  %1076 = vmatmul.mubr.f32.gmra.mrb[0].mxu0 %v728
  %v1077 = vpop.f32.mrb[0].mxu0
  %v1078 = vadd.f32 %v764, %v1077
  %v1079 = vpop.f32.mrb[0].mxu0
  %1080 = vmatprep.mubr.f32.mxu0 0.0
  %1081 = vmatmul.mubr.f32.gmra.mrb[0].mxu0 %v729
  %v1082 = vpop.f32.mrb[0].mxu0
  %v1083 = vadd.f32 %v764, %v1082
  %v1084 = vpop.f32.mrb[0].mxu0
  %1085 = vmatprep.mubr.f32.mxu0 0.0
  %1086 = vmatmul.mubr.f32.gmra.mrb[0].mxu0 %v730
  %v1087 = vpop.f32.mrb[0].mxu0
  %v1088 = vadd.f32 %v764, %v1087
  %v1089 = vpop.f32.mrb[0].mxu0
  %1090 = vmatprep.mubr.f32.mxu0 0.0
  %1091 = vmatmul.mubr.f32.gmra.mrb[0].mxu0 %v731
  %v1092 = vpop.f32.mrb[0].mxu0
  %v1093 = vadd.f32 %v764, %v1092
  %v1094 = vpop.f32.mrb[0].mxu0
  %1095 = vmatprep.mubr.f32.mxu0 0.0
  %1096 = vmatmul.mubr.f32.gmra.mrb[0].mxu0 %v732
  %v1097 = vpop.f32.mrb[0].mxu0
  %v1098 = vadd.f32 %v764, %v1097
  %v1099 = vpop.f32.mrb[0].mxu0
  %1100 = vmatprep.mubr.f32.mxu0 0.0
  %1101 = vmatmul.mubr.f32.gmra.mrb[0].mxu0 %v733
  %v1102 = vpop.f32.mrb[0].mxu0
  %v1103 = vadd.f32 %v764, %v1102
  %v1104 = vpop.f32.mrb[0].mxu0
  %1105 = vmatprep.mubr.f32.mxu0 0.0
  %1106 = vmatmul.mubr.f32.gmra.mrb[0].mxu0 %v734
  %v1107 = vpop.f32.mrb[0].mxu0
  %v1108 = vadd.f32 %v764, %v1107
  %v1109 = vpop.f32.mrb[0].mxu0
  %1110 = vmatprep.mubr.f32.mxu0 0.0
  %1111 = vmatmul.mubr.f32.gmra.mrb[0].mxu0 %v735
  %v1112 = vpop.f32.mrb[0].mxu0
  %v1113 = vadd.f32 %v764, %v1112
  %v1114 = vpop.f32.mrb[0].mxu0
  %1115 = vmatprep.mubr.f32.mxu0 0.0
  %1116 = vmatmul.mubr.f32.gmra.mrb[0].mxu0 %v736
  %v1117 = vpop.f32.mrb[0].mxu0
  %v1118 = vadd.f32 %v764, %v1117
  %v1119 = vpop.f32.mrb[0].mxu0
  %1120 = vmatprep.mubr.f32.mxu0 0.0
  %1121 = vmatmul.mubr.f32.gmra.mrb[0].mxu0 %v737
  %v1122 = vpop.f32.mrb[0].mxu0
  %v1123 = vadd.f32 %v764, %v1122
  %v1124 = vpop.f32.mrb[0].mxu0
  %1125 = vmatprep.mubr.f32.mxu0 0.0
  %1126 = vmatmul.mubr.f32.gmra.mrb[0].mxu0 %v738
  %v1127 = vpop.f32.mrb[0].mxu0
  %v1128 = vadd.f32 %v764, %v1127
  %v1129 = vpop.f32.mrb[0].mxu0
  %1130 = vmatprep.mubr.f32.mxu0 0.0
  %1131 = vmatmul.mubr.f32.gmra.mrb[0].mxu0 %v739
  %v1132 = vpop.f32.mrb[0].mxu0
  %v1133 = vadd.f32 %v764, %v1132
  %v1134 = vpop.f32.mrb[0].mxu0
  %1135 = vmatprep.mubr.f32.mxu0 0.0
  %1136 = vmatmul.mubr.f32.gmra.mrb[0].mxu0 %v740
  %v1137 = vpop.f32.mrb[0].mxu0
  %v1138 = vadd.f32 %v764, %v1137
  %v1139 = vpop.f32.mrb[0].mxu0
  %1140 = vmatprep.mubr.f32.mxu0 0.0
  %1141 = vmatmul.mubr.f32.gmra.mrb[0].mxu0 %v741
  %v1142 = vpop.f32.mrb[0].mxu0
  %v1143 = vadd.f32 %v764, %v1142
  %v1144 = vpop.f32.mrb[0].mxu0
  %1145 = vmatprep.mubr.f32.mxu0 0.0
  %1146 = vmatmul.mubr.f32.gmra.mrb[0].mxu0 %v742
  %v1147 = vpop.f32.mrb[0].mxu0
  %v1148 = vadd.f32 %v764, %v1147
  %v1149 = vpop.f32.mrb[0].mxu0
  %1150 = vdwg.mxu0
  %v1151 = vmax.f32 %v833, 0.0
  %v1152 = vmax.f32 %v838, 0.0
  %v1153 = vmax.f32 %v843, 0.0
  %v1154 = vmax.f32 %v848, 0.0
  %v1155 = vmax.f32 %v853, 0.0
  %v1156 = vmax.f32 %v858, 0.0
  %v1157 = vmax.f32 %v863, 0.0
  %v1158 = vmax.f32 %v868, 0.0
  %v1159 = vmax.f32 %v873, 0.0
  %v1160 = vmax.f32 %v878, 0.0
  %v1161 = vmax.f32 %v883, 0.0
  %v1162 = vmax.f32 %v888, 0.0
  %v1163 = vmax.f32 %v893, 0.0
  %v1164 = vmax.f32 %v898, 0.0
  %v1165 = vmax.f32 %v903, 0.0
  %v1166 = vmax.f32 %v908, 0.0
  %v1167 = vmax.f32 %v913, 0.0
  %v1168 = vmax.f32 %v918, 0.0
  %v1169 = vmax.f32 %v923, 0.0
  %v1170 = vmax.f32 %v928, 0.0
  %v1171 = vmax.f32 %v933, 0.0
  %v1172 = vmax.f32 %v938, 0.0
  %v1173 = vmax.f32 %v943, 0.0
  %v1174 = vmax.f32 %v948, 0.0
  %v1175 = vmax.f32 %v953, 0.0
  %v1176 = vmax.f32 %v958, 0.0
  %v1177 = vmax.f32 %v963, 0.0
  %v1178 = vmax.f32 %v968, 0.0
  %v1179 = vmax.f32 %v973, 0.0
  %v1180 = vmax.f32 %v978, 0.0
  %v1181 = vmax.f32 %v983, 0.0
  %v1182 = vmax.f32 %v988, 0.0
  %v1183 = vmax.f32 %v993, 0.0
  %v1184 = vmax.f32 %v998, 0.0
  %v1185 = vmax.f32 %v1003, 0.0
  %v1186 = vmax.f32 %v1008, 0.0
  %v1187 = vmax.f32 %v1013, 0.0
  %v1188 = vmax.f32 %v1018, 0.0
  %v1189 = vmax.f32 %v1023, 0.0
  %v1190 = vmax.f32 %v1028, 0.0
  %v1191 = vmax.f32 %v1033, 0.0
  %v1192 = vmax.f32 %v1038, 0.0
  %v1193 = vmax.f32 %v1043, 0.0
  %v1194 = vmax.f32 %v1048, 0.0
  %v1195 = vmax.f32 %v1053, 0.0
  %v1196 = vmax.f32 %v1058, 0.0
  %v1197 = vmax.f32 %v1063, 0.0
  %v1198 = vmax.f32 %v1068, 0.0
  %v1199 = vmax.f32 %v1073, 0.0
  %v1200 = vmax.f32 %v1078, 0.0
  %v1201 = vmax.f32 %v1083, 0.0
  %v1202 = vmax.f32 %v1088, 0.0
  %v1203 = vmax.f32 %v1093, 0.0
  %v1204 = vmax.f32 %v1098, 0.0
  %v1205 = vmax.f32 %v1103, 0.0
  %v1206 = vmax.f32 %v1108, 0.0
  %v1207 = vmax.f32 %v1113, 0.0
  %v1208 = vmax.f32 %v1118, 0.0
  %v1209 = vmax.f32 %v1123, 0.0
  %v1210 = vmax.f32 %v1128, 0.0
  %v1211 = vmax.f32 %v1133, 0.0
  %v1212 = vmax.f32 %v1138, 0.0
  %v1213 = vmax.f32 %v1143, 0.0
  %v1214 = vmax.f32 %v1148, 0.0
  %v1215 = vld [vmem:[%s5] sm:$0xff]
  %v1216 = vld [vmem:[%s5 + $0x8] sm:$0xff]
  %v1217 = vld [vmem:[%s5 + $0x10] sm:$0xff]
  %v1218 = vld [vmem:[%s5 + $0x18] sm:$0xff]
  %v1219 = vld [vmem:[%s5 + $0x20] sm:$0xff]
  %v1220 = vld [vmem:[%s5 + $0x28] sm:$0xff]
  %v1221 = vld [vmem:[%s5 + $0x30] sm:$0xff]
  %v1222 = vld [vmem:[%s5 + $0x38] sm:$0xff]
  %v1223 = vld [vmem:[%s6] sm:$0x1]
  %v1225 = vlaneseq
  %v1226 = vshrl.u32 %v1225, 7
  %v1227 = vsub.s32 0, %v1226
  %v1228 = vrot.slane %v1223, %v1227
  %vm1230 = vcmask 523264
  %v1232 = vsel %vm1230, %v1151, 0
  %v1235 = vsel %vm1230, %v1152, 0
  %v1238 = vsel %vm1230, %v1153, 0
  %v1241 = vsel %vm1230, %v1154, 0
  %v1244 = vsel %vm1230, %v1155, 0
  %v1247 = vsel %vm1230, %v1156, 0
  %v1250 = vsel %vm1230, %v1157, 0
  %v1253 = vsel %vm1230, %v1158, 0
  %v1256 = vsel %vm1230, %v1159, 0
  %v1259 = vsel %vm1230, %v1160, 0
  %v1262 = vsel %vm1230, %v1161, 0
  %v1265 = vsel %vm1230, %v1162, 0
  %v1268 = vsel %vm1230, %v1163, 0
  %v1271 = vsel %vm1230, %v1164, 0
  %v1274 = vsel %vm1230, %v1165, 0
  %v1277 = vsel %vm1230, %v1166, 0
  %v1280 = vsel %vm1230, %v1167, 0
  %v1283 = vsel %vm1230, %v1168, 0
  %v1286 = vsel %vm1230, %v1169, 0
  %v1289 = vsel %vm1230, %v1170, 0
  %v1292 = vsel %vm1230, %v1171, 0
  %v1295 = vsel %vm1230, %v1172, 0
  %v1298 = vsel %vm1230, %v1173, 0
  %v1301 = vsel %vm1230, %v1174, 0
  %v1304 = vsel %vm1230, %v1175, 0
  %v1307 = vsel %vm1230, %v1176, 0
  %v1310 = vsel %vm1230, %v1177, 0
  %v1313 = vsel %vm1230, %v1178, 0
  %v1316 = vsel %vm1230, %v1179, 0
  %v1319 = vsel %vm1230, %v1180, 0
  %v1322 = vsel %vm1230, %v1181, 0
  %v1325 = vsel %vm1230, %v1182, 0
  %v1328 = vsel %vm1230, %v1183, 0
  %v1331 = vsel %vm1230, %v1184, 0
  %v1334 = vsel %vm1230, %v1185, 0
  %v1337 = vsel %vm1230, %v1186, 0
  %v1340 = vsel %vm1230, %v1187, 0
  %v1343 = vsel %vm1230, %v1188, 0
  %v1346 = vsel %vm1230, %v1189, 0
  %v1349 = vsel %vm1230, %v1190, 0
  %v1352 = vsel %vm1230, %v1191, 0
  %v1355 = vsel %vm1230, %v1192, 0
  %v1358 = vsel %vm1230, %v1193, 0
  %v1361 = vsel %vm1230, %v1194, 0
  %v1364 = vsel %vm1230, %v1195, 0
  %v1367 = vsel %vm1230, %v1196, 0
  %v1370 = vsel %vm1230, %v1197, 0
  %v1373 = vsel %vm1230, %v1198, 0
  %v1376 = vsel %vm1230, %v1199, 0
  %v1379 = vsel %vm1230, %v1200, 0
  %v1382 = vsel %vm1230, %v1201, 0
  %v1385 = vsel %vm1230, %v1202, 0
  %v1388 = vsel %vm1230, %v1203, 0
  %v1391 = vsel %vm1230, %v1204, 0
  %v1394 = vsel %vm1230, %v1205, 0
  %v1397 = vsel %vm1230, %v1206, 0
  %v1400 = vsel %vm1230, %v1207, 0
  %v1403 = vsel %vm1230, %v1208, 0
  %v1406 = vsel %vm1230, %v1209, 0
  %v1409 = vsel %vm1230, %v1210, 0
  %v1412 = vsel %vm1230, %v1211, 0
  %v1415 = vsel %vm1230, %v1212, 0
  %v1418 = vsel %vm1230, %v1213, 0
  %v1421 = vsel %vm1230, %v1214, 0
  %1423 = vmatprep.subr.mxu0 0.0
  %1424 = vmatpush1.msra.mxu0 %v1215
  %1425 = vmatprep.subr.mxu0 0.0
  %1426 = vmatpush1.msra.mxu0 %v1216
  %1427 = vmatprep.subr.mxu0 0.0
  %1428 = vmatpush1.msra.mxu0 %v1217
  %1429 = vmatprep.subr.mxu0 0.0
  %1430 = vmatpush1.msra.mxu0 %v1218
  %1431 = vmatprep.subr.mxu0 0.0
  %1432 = vmatpush1.msra.mxu0 %v1219
  %1433 = vmatprep.subr.mxu0 0.0
  %1434 = vmatpush1.msra.mxu0 %v1220
  %1435 = vmatprep.subr.mxu0 0.0
  %1436 = vmatpush1.msra.mxu0 %v1221
  %1437 = vmatprep.subr.mxu0 0.0
  %1438 = vmatpush1.msra.mxu0 %v1222
  %1439 = vmatprep.subr.mxu0 0.0
  %1440 = vmatpush1.msra.mxu0 0.0
  %1441 = vmatprep.subr.mxu0 0.0
  %1442 = vmatpush1.msra.mxu0 0.0
  %1443 = vmatprep.subr.mxu0 0.0
  %1444 = vmatpush1.msra.mxu0 0.0
  %1445 = vmatprep.subr.mxu0 0.0
  %1446 = vmatpush1.msra.mxu0 0.0
  %1447 = vmatprep.subr.mxu0 0.0
  %1448 = vmatpush1.msra.mxu0 0.0
  %1449 = vmatprep.subr.mxu0 0.0
  %1450 = vmatpush1.msra.mxu0 0.0
  %1451 = vmatprep.subr.mxu0 0.0
  %1452 = vmatpush1.msra.mxu0 0.0
  %1453 = vmatprep.subr.mxu0 0.0
  %1454 = vmatpush1.msra.mxu0 0.0
  %1455 = vmatprep.subr.mxu0 0.0
  %1456 = vmatpush1.msra.mxu0 0.0
  %1457 = vmatprep.subr.mxu0 0.0
  %1458 = vmatpush1.msra.mxu0 0.0
  %1459 = vmatprep.subr.mxu0 0.0
  %1460 = vmatpush1.msra.mxu0 0.0
  %1461 = vmatprep.subr.mxu0 0.0
  %1462 = vmatpush1.msra.mxu0 0.0
  %1463 = vmatprep.subr.mxu0 0.0
  %1464 = vmatpush1.msra.mxu0 0.0
  %1465 = vmatprep.subr.mxu0 0.0
  %1466 = vmatpush1.msra.mxu0 0.0
  %1467 = vmatprep.subr.mxu0 0.0
  %1468 = vmatpush1.msra.mxu0 0.0
  %1469 = vmatprep.subr.mxu0 0.0
  %1470 = vmatpush1.msra.mxu0 0.0
  %1471 = vmatprep.subr.mxu0 0.0
  %1472 = vmatpush1.msra.mxu0 0.0
  %1473 = vmatprep.subr.mxu0 0.0
  %1474 = vmatpush1.msra.mxu0 0.0
  %1475 = vmatprep.subr.mxu0 0.0
  %1476 = vmatpush1.msra.mxu0 0.0
  %1477 = vmatprep.subr.mxu0 0.0
  %1478 = vmatpush1.msra.mxu0 0.0
  %1479 = vmatprep.subr.mxu0 0.0
  %1480 = vmatpush1.msra.mxu0 0.0
  %1481 = vmatprep.subr.mxu0 0.0
  %1482 = vmatpush1.msra.mxu0 0.0
  %1483 = vmatprep.subr.mxu0 0.0
  %1484 = vmatpush1.msra.mxu0 0.0
  %1485 = vmatprep.subr.mxu0 0.0
  %1486 = vmatpush1.msra.mxu0 0.0
  %1487 = vmatprep.mubr.f32.mxu0 0.0
  %1488 = vmatmul.mubr.f32.gmra.mrb[0].mxu0 %v1232
  %v1489 = vpop.f32.mrb[0].mxu0
  %v1490 = vadd.f32 %v1228, %v1489
  %v1491 = vpop.f32.mrb[0].mxu0
  %1492 = vmatprep.mubr.f32.mxu0 0.0
  %1493 = vmatmul.mubr.f32.gmra.mrb[0].mxu0 %v1235
  %v1494 = vpop.f32.mrb[0].mxu0
  %v1495 = vadd.f32 %v1228, %v1494
  %v1496 = vpop.f32.mrb[0].mxu0
  %1497 = vmatprep.mubr.f32.mxu0 0.0
  %1498 = vmatmul.mubr.f32.gmra.mrb[0].mxu0 %v1238
  %v1499 = vpop.f32.mrb[0].mxu0
  %v1500 = vadd.f32 %v1228, %v1499
  %v1501 = vpop.f32.mrb[0].mxu0
  %1502 = vmatprep.mubr.f32.mxu0 0.0
  %1503 = vmatmul.mubr.f32.gmra.mrb[0].mxu0 %v1241
  %v1504 = vpop.f32.mrb[0].mxu0
  %v1505 = vadd.f32 %v1228, %v1504
  %v1506 = vpop.f32.mrb[0].mxu0
  %1507 = vmatprep.mubr.f32.mxu0 0.0
  %1508 = vmatmul.mubr.f32.gmra.mrb[0].mxu0 %v1244
  %v1509 = vpop.f32.mrb[0].mxu0
  %v1510 = vadd.f32 %v1228, %v1509
  %v1511 = vpop.f32.mrb[0].mxu0
  %1512 = vmatprep.mubr.f32.mxu0 0.0
  %1513 = vmatmul.mubr.f32.gmra.mrb[0].mxu0 %v1247
  %v1514 = vpop.f32.mrb[0].mxu0
  %v1515 = vadd.f32 %v1228, %v1514
  %v1516 = vpop.f32.mrb[0].mxu0
  %1517 = vmatprep.mubr.f32.mxu0 0.0
  %1518 = vmatmul.mubr.f32.gmra.mrb[0].mxu0 %v1250
  %v1519 = vpop.f32.mrb[0].mxu0
  %v1520 = vadd.f32 %v1228, %v1519
  %v1521 = vpop.f32.mrb[0].mxu0
  %1522 = vmatprep.mubr.f32.mxu0 0.0
  %1523 = vmatmul.mubr.f32.gmra.mrb[0].mxu0 %v1253
  %v1524 = vpop.f32.mrb[0].mxu0
  %v1525 = vadd.f32 %v1228, %v1524
  %v1526 = vpop.f32.mrb[0].mxu0
  %1527 = vmatprep.mubr.f32.mxu0 0.0
  %1528 = vmatmul.mubr.f32.gmra.mrb[0].mxu0 %v1256
  %v1529 = vpop.f32.mrb[0].mxu0
  %v1530 = vadd.f32 %v1228, %v1529
  %v1531 = vpop.f32.mrb[0].mxu0
  %1532 = vmatprep.mubr.f32.mxu0 0.0
  %1533 = vmatmul.mubr.f32.gmra.mrb[0].mxu0 %v1259
  %v1534 = vpop.f32.mrb[0].mxu0
  %v1535 = vadd.f32 %v1228, %v1534
  %v1536 = vpop.f32.mrb[0].mxu0
  %1537 = vmatprep.mubr.f32.mxu0 0.0
  %1538 = vmatmul.mubr.f32.gmra.mrb[0].mxu0 %v1262
  %v1539 = vpop.f32.mrb[0].mxu0
  %v1540 = vadd.f32 %v1228, %v1539
  %v1541 = vpop.f32.mrb[0].mxu0
  %1542 = vmatprep.mubr.f32.mxu0 0.0
  %1543 = vmatmul.mubr.f32.gmra.mrb[0].mxu0 %v1265
  %v1544 = vpop.f32.mrb[0].mxu0
  %v1545 = vadd.f32 %v1228, %v1544
  %v1546 = vpop.f32.mrb[0].mxu0
  %1547 = vmatprep.mubr.f32.mxu0 0.0
  %1548 = vmatmul.mubr.f32.gmra.mrb[0].mxu0 %v1268
  %v1549 = vpop.f32.mrb[0].mxu0
  %v1550 = vadd.f32 %v1228, %v1549
  %v1551 = vpop.f32.mrb[0].mxu0
  %1552 = vmatprep.mubr.f32.mxu0 0.0
  %1553 = vmatmul.mubr.f32.gmra.mrb[0].mxu0 %v1271
  %v1554 = vpop.f32.mrb[0].mxu0
  %v1555 = vadd.f32 %v1228, %v1554
  %v1556 = vpop.f32.mrb[0].mxu0
  %1557 = vmatprep.mubr.f32.mxu0 0.0
  %1558 = vmatmul.mubr.f32.gmra.mrb[0].mxu0 %v1274
  %v1559 = vpop.f32.mrb[0].mxu0
  %v1560 = vadd.f32 %v1228, %v1559
  %v1561 = vpop.f32.mrb[0].mxu0
  %1562 = vmatprep.mubr.f32.mxu0 0.0
  %1563 = vmatmul.mubr.f32.gmra.mrb[0].mxu0 %v1277
  %v1564 = vpop.f32.mrb[0].mxu0
  %v1565 = vadd.f32 %v1228, %v1564
  %v1566 = vpop.f32.mrb[0].mxu0
  %1567 = vmatprep.mubr.f32.mxu0 0.0
  %1568 = vmatmul.mubr.f32.gmra.mrb[0].mxu0 %v1280
  %v1569 = vpop.f32.mrb[0].mxu0
  %v1570 = vadd.f32 %v1228, %v1569
  %v1571 = vpop.f32.mrb[0].mxu0
  %1572 = vmatprep.mubr.f32.mxu0 0.0
  %1573 = vmatmul.mubr.f32.gmra.mrb[0].mxu0 %v1283
  %v1574 = vpop.f32.mrb[0].mxu0
  %v1575 = vadd.f32 %v1228, %v1574
  %v1576 = vpop.f32.mrb[0].mxu0
  %1577 = vmatprep.mubr.f32.mxu0 0.0
  %1578 = vmatmul.mubr.f32.gmra.mrb[0].mxu0 %v1286
  %v1579 = vpop.f32.mrb[0].mxu0
  %v1580 = vadd.f32 %v1228, %v1579
  %v1581 = vpop.f32.mrb[0].mxu0
  %1582 = vmatprep.mubr.f32.mxu0 0.0
  %1583 = vmatmul.mubr.f32.gmra.mrb[0].mxu0 %v1289
  %v1584 = vpop.f32.mrb[0].mxu0
  %v1585 = vadd.f32 %v1228, %v1584
  %v1586 = vpop.f32.mrb[0].mxu0
  %1587 = vmatprep.mubr.f32.mxu0 0.0
  %1588 = vmatmul.mubr.f32.gmra.mrb[0].mxu0 %v1292
  %v1589 = vpop.f32.mrb[0].mxu0
  %v1590 = vadd.f32 %v1228, %v1589
  %v1591 = vpop.f32.mrb[0].mxu0
  %1592 = vmatprep.mubr.f32.mxu0 0.0
  %1593 = vmatmul.mubr.f32.gmra.mrb[0].mxu0 %v1295
  %v1594 = vpop.f32.mrb[0].mxu0
  %v1595 = vadd.f32 %v1228, %v1594
  %v1596 = vpop.f32.mrb[0].mxu0
  %1597 = vmatprep.mubr.f32.mxu0 0.0
  %1598 = vmatmul.mubr.f32.gmra.mrb[0].mxu0 %v1298
  %v1599 = vpop.f32.mrb[0].mxu0
  %v1600 = vadd.f32 %v1228, %v1599
  %v1601 = vpop.f32.mrb[0].mxu0
  %1602 = vmatprep.mubr.f32.mxu0 0.0
  %1603 = vmatmul.mubr.f32.gmra.mrb[0].mxu0 %v1301
  %v1604 = vpop.f32.mrb[0].mxu0
  %v1605 = vadd.f32 %v1228, %v1604
  %v1606 = vpop.f32.mrb[0].mxu0
  %1607 = vmatprep.mubr.f32.mxu0 0.0
  %1608 = vmatmul.mubr.f32.gmra.mrb[0].mxu0 %v1304
  %v1609 = vpop.f32.mrb[0].mxu0
  %v1610 = vadd.f32 %v1228, %v1609
  %v1611 = vpop.f32.mrb[0].mxu0
  %1612 = vmatprep.mubr.f32.mxu0 0.0
  %1613 = vmatmul.mubr.f32.gmra.mrb[0].mxu0 %v1307
  %v1614 = vpop.f32.mrb[0].mxu0
  %v1615 = vadd.f32 %v1228, %v1614
  %v1616 = vpop.f32.mrb[0].mxu0
  %1617 = vmatprep.mubr.f32.mxu0 0.0
  %1618 = vmatmul.mubr.f32.gmra.mrb[0].mxu0 %v1310
  %v1619 = vpop.f32.mrb[0].mxu0
  %v1620 = vadd.f32 %v1228, %v1619
  %v1621 = vpop.f32.mrb[0].mxu0
  %1622 = vmatprep.mubr.f32.mxu0 0.0
  %1623 = vmatmul.mubr.f32.gmra.mrb[0].mxu0 %v1313
  %v1624 = vpop.f32.mrb[0].mxu0
  %v1625 = vadd.f32 %v1228, %v1624
  %v1626 = vpop.f32.mrb[0].mxu0
  %1627 = vmatprep.mubr.f32.mxu0 0.0
  %1628 = vmatmul.mubr.f32.gmra.mrb[0].mxu0 %v1316
  %v1629 = vpop.f32.mrb[0].mxu0
  %v1630 = vadd.f32 %v1228, %v1629
  %v1631 = vpop.f32.mrb[0].mxu0
  %1632 = vmatprep.mubr.f32.mxu0 0.0
  %1633 = vmatmul.mubr.f32.gmra.mrb[0].mxu0 %v1319
  %v1634 = vpop.f32.mrb[0].mxu0
  %v1635 = vadd.f32 %v1228, %v1634
  %v1636 = vpop.f32.mrb[0].mxu0
  %1637 = vmatprep.mubr.f32.mxu0 0.0
  %1638 = vmatmul.mubr.f32.gmra.mrb[0].mxu0 %v1322
  %v1639 = vpop.f32.mrb[0].mxu0
  %v1640 = vadd.f32 %v1228, %v1639
  %v1641 = vpop.f32.mrb[0].mxu0
  %1642 = vmatprep.mubr.f32.mxu0 0.0
  %1643 = vmatmul.mubr.f32.gmra.mrb[0].mxu0 %v1325
  %v1644 = vpop.f32.mrb[0].mxu0
  %v1645 = vadd.f32 %v1228, %v1644
  %v1646 = vpop.f32.mrb[0].mxu0
  %1647 = vmatprep.mubr.f32.mxu0 0.0
  %1648 = vmatmul.mubr.f32.gmra.mrb[0].mxu0 %v1328
  %v1649 = vpop.f32.mrb[0].mxu0
  %v1650 = vadd.f32 %v1228, %v1649
  %v1651 = vpop.f32.mrb[0].mxu0
  %1652 = vmatprep.mubr.f32.mxu0 0.0
  %1653 = vmatmul.mubr.f32.gmra.mrb[0].mxu0 %v1331
  %v1654 = vpop.f32.mrb[0].mxu0
  %v1655 = vadd.f32 %v1228, %v1654
  %v1656 = vpop.f32.mrb[0].mxu0
  %1657 = vmatprep.mubr.f32.mxu0 0.0
  %1658 = vmatmul.mubr.f32.gmra.mrb[0].mxu0 %v1334
  %v1659 = vpop.f32.mrb[0].mxu0
  %v1660 = vadd.f32 %v1228, %v1659
  %v1661 = vpop.f32.mrb[0].mxu0
  %1662 = vmatprep.mubr.f32.mxu0 0.0
  %1663 = vmatmul.mubr.f32.gmra.mrb[0].mxu0 %v1337
  %v1664 = vpop.f32.mrb[0].mxu0
  %v1665 = vadd.f32 %v1228, %v1664
  %v1666 = vpop.f32.mrb[0].mxu0
  %1667 = vmatprep.mubr.f32.mxu0 0.0
  %1668 = vmatmul.mubr.f32.gmra.mrb[0].mxu0 %v1340
  %v1669 = vpop.f32.mrb[0].mxu0
  %v1670 = vadd.f32 %v1228, %v1669
  %v1671 = vpop.f32.mrb[0].mxu0
  %1672 = vmatprep.mubr.f32.mxu0 0.0
  %1673 = vmatmul.mubr.f32.gmra.mrb[0].mxu0 %v1343
  %v1674 = vpop.f32.mrb[0].mxu0
  %v1675 = vadd.f32 %v1228, %v1674
  %v1676 = vpop.f32.mrb[0].mxu0
  %1677 = vmatprep.mubr.f32.mxu0 0.0
  %1678 = vmatmul.mubr.f32.gmra.mrb[0].mxu0 %v1346
  %v1679 = vpop.f32.mrb[0].mxu0
  %v1680 = vadd.f32 %v1228, %v1679
  %v1681 = vpop.f32.mrb[0].mxu0
  %1682 = vmatprep.mubr.f32.mxu0 0.0
  %1683 = vmatmul.mubr.f32.gmra.mrb[0].mxu0 %v1349
  %v1684 = vpop.f32.mrb[0].mxu0
  %v1685 = vadd.f32 %v1228, %v1684
  %v1686 = vpop.f32.mrb[0].mxu0
  %1687 = vmatprep.mubr.f32.mxu0 0.0
  %1688 = vmatmul.mubr.f32.gmra.mrb[0].mxu0 %v1352
  %v1689 = vpop.f32.mrb[0].mxu0
  %v1690 = vadd.f32 %v1228, %v1689
  %v1691 = vpop.f32.mrb[0].mxu0
  %1692 = vmatprep.mubr.f32.mxu0 0.0
  %1693 = vmatmul.mubr.f32.gmra.mrb[0].mxu0 %v1355
  %v1694 = vpop.f32.mrb[0].mxu0
  %v1695 = vadd.f32 %v1228, %v1694
  %v1696 = vpop.f32.mrb[0].mxu0
  %1697 = vmatprep.mubr.f32.mxu0 0.0
  %1698 = vmatmul.mubr.f32.gmra.mrb[0].mxu0 %v1358
  %v1699 = vpop.f32.mrb[0].mxu0
  %v1700 = vadd.f32 %v1228, %v1699
  %v1701 = vpop.f32.mrb[0].mxu0
  %1702 = vmatprep.mubr.f32.mxu0 0.0
  %1703 = vmatmul.mubr.f32.gmra.mrb[0].mxu0 %v1361
  %v1704 = vpop.f32.mrb[0].mxu0
  %v1705 = vadd.f32 %v1228, %v1704
  %v1706 = vpop.f32.mrb[0].mxu0
  %1707 = vmatprep.mubr.f32.mxu0 0.0
  %1708 = vmatmul.mubr.f32.gmra.mrb[0].mxu0 %v1364
  %v1709 = vpop.f32.mrb[0].mxu0
  %v1710 = vadd.f32 %v1228, %v1709
  %v1711 = vpop.f32.mrb[0].mxu0
  %1712 = vmatprep.mubr.f32.mxu0 0.0
  %1713 = vmatmul.mubr.f32.gmra.mrb[0].mxu0 %v1367
  %v1714 = vpop.f32.mrb[0].mxu0
  %v1715 = vadd.f32 %v1228, %v1714
  %v1716 = vpop.f32.mrb[0].mxu0
  %1717 = vmatprep.mubr.f32.mxu0 0.0
  %1718 = vmatmul.mubr.f32.gmra.mrb[0].mxu0 %v1370
  %v1719 = vpop.f32.mrb[0].mxu0
  %v1720 = vadd.f32 %v1228, %v1719
  %v1721 = vpop.f32.mrb[0].mxu0
  %1722 = vmatprep.mubr.f32.mxu0 0.0
  %1723 = vmatmul.mubr.f32.gmra.mrb[0].mxu0 %v1373
  %v1724 = vpop.f32.mrb[0].mxu0
  %v1725 = vadd.f32 %v1228, %v1724
  %v1726 = vpop.f32.mrb[0].mxu0
  %1727 = vmatprep.mubr.f32.mxu0 0.0
  %1728 = vmatmul.mubr.f32.gmra.mrb[0].mxu0 %v1376
  %v1729 = vpop.f32.mrb[0].mxu0
  %v1730 = vadd.f32 %v1228, %v1729
  %v1731 = vpop.f32.mrb[0].mxu0
  %1732 = vmatprep.mubr.f32.mxu0 0.0
  %1733 = vmatmul.mubr.f32.gmra.mrb[0].mxu0 %v1379
  %v1734 = vpop.f32.mrb[0].mxu0
  %v1735 = vadd.f32 %v1228, %v1734
  %v1736 = vpop.f32.mrb[0].mxu0
  %1737 = vmatprep.mubr.f32.mxu0 0.0
  %1738 = vmatmul.mubr.f32.gmra.mrb[0].mxu0 %v1382
  %v1739 = vpop.f32.mrb[0].mxu0
  %v1740 = vadd.f32 %v1228, %v1739
  %v1741 = vpop.f32.mrb[0].mxu0
  %1742 = vmatprep.mubr.f32.mxu0 0.0
  %1743 = vmatmul.mubr.f32.gmra.mrb[0].mxu0 %v1385
  %v1744 = vpop.f32.mrb[0].mxu0
  %v1745 = vadd.f32 %v1228, %v1744
  %v1746 = vpop.f32.mrb[0].mxu0
  %1747 = vmatprep.mubr.f32.mxu0 0.0
  %1748 = vmatmul.mubr.f32.gmra.mrb[0].mxu0 %v1388
  %v1749 = vpop.f32.mrb[0].mxu0
  %v1750 = vadd.f32 %v1228, %v1749
  %v1751 = vpop.f32.mrb[0].mxu0
  %1752 = vmatprep.mubr.f32.mxu0 0.0
  %1753 = vmatmul.mubr.f32.gmra.mrb[0].mxu0 %v1391
  %v1754 = vpop.f32.mrb[0].mxu0
  %v1755 = vadd.f32 %v1228, %v1754
  %v1756 = vpop.f32.mrb[0].mxu0
  %1757 = vmatprep.mubr.f32.mxu0 0.0
  %1758 = vmatmul.mubr.f32.gmra.mrb[0].mxu0 %v1394
  %v1759 = vpop.f32.mrb[0].mxu0
  %v1760 = vadd.f32 %v1228, %v1759
  %v1761 = vpop.f32.mrb[0].mxu0
  %1762 = vmatprep.mubr.f32.mxu0 0.0
  %1763 = vmatmul.mubr.f32.gmra.mrb[0].mxu0 %v1397
  %v1764 = vpop.f32.mrb[0].mxu0
  %v1765 = vadd.f32 %v1228, %v1764
  %v1766 = vpop.f32.mrb[0].mxu0
  %1767 = vmatprep.mubr.f32.mxu0 0.0
  %1768 = vmatmul.mubr.f32.gmra.mrb[0].mxu0 %v1400
  %v1769 = vpop.f32.mrb[0].mxu0
  %v1770 = vadd.f32 %v1228, %v1769
  %v1771 = vpop.f32.mrb[0].mxu0
  %1772 = vmatprep.mubr.f32.mxu0 0.0
  %1773 = vmatmul.mubr.f32.gmra.mrb[0].mxu0 %v1403
  %v1774 = vpop.f32.mrb[0].mxu0
  %v1775 = vadd.f32 %v1228, %v1774
  %v1776 = vpop.f32.mrb[0].mxu0
  %1777 = vmatprep.mubr.f32.mxu0 0.0
  %1778 = vmatmul.mubr.f32.gmra.mrb[0].mxu0 %v1406
  %v1779 = vpop.f32.mrb[0].mxu0
  %v1780 = vadd.f32 %v1228, %v1779
  %v1781 = vpop.f32.mrb[0].mxu0
  %1782 = vmatprep.mubr.f32.mxu0 0.0
  %1783 = vmatmul.mubr.f32.gmra.mrb[0].mxu0 %v1409
  %v1784 = vpop.f32.mrb[0].mxu0
  %v1785 = vadd.f32 %v1228, %v1784
  %v1786 = vpop.f32.mrb[0].mxu0
  %1787 = vmatprep.mubr.f32.mxu0 0.0
  %1788 = vmatmul.mubr.f32.gmra.mrb[0].mxu0 %v1412
  %v1789 = vpop.f32.mrb[0].mxu0
  %v1790 = vadd.f32 %v1228, %v1789
  %v1791 = vpop.f32.mrb[0].mxu0
  %1792 = vmatprep.mubr.f32.mxu0 0.0
  %1793 = vmatmul.mubr.f32.gmra.mrb[0].mxu0 %v1415
  %v1794 = vpop.f32.mrb[0].mxu0
  %v1795 = vadd.f32 %v1228, %v1794
  %v1796 = vpop.f32.mrb[0].mxu0
  %1797 = vmatprep.mubr.f32.mxu0 0.0
  %1798 = vmatmul.mubr.f32.gmra.mrb[0].mxu0 %v1418
  %v1799 = vpop.f32.mrb[0].mxu0
  %v1800 = vadd.f32 %v1228, %v1799
  %v1801 = vpop.f32.mrb[0].mxu0
  %1802 = vmatprep.mubr.f32.mxu0 0.0
  %1803 = vmatmul.mubr.f32.gmra.mrb[0].mxu0 %v1421
  %v1804 = vpop.f32.mrb[0].mxu0
  %v1805 = vadd.f32 %v1228, %v1804
  %v1806 = vpop.f32.mrb[0].mxu0
  %1807 = vdwg.mxu0
  %vm1808 = vcmask 130048
  %1809 = vst.msk [vmem:[%s7] sm:$0xff] %vm1808, %v1490
  %1810 = vst.msk [vmem:[%s7 + $0x8] sm:$0xff] %vm1808, %v1495
  %1811 = vst.msk [vmem:[%s7 + $0x10] sm:$0xff] %vm1808, %v1500
  %1812 = vst.msk [vmem:[%s7 + $0x18] sm:$0xff] %vm1808, %v1505
  %1813 = vst.msk [vmem:[%s7 + $0x20] sm:$0xff] %vm1808, %v1510
  %1814 = vst.msk [vmem:[%s7 + $0x28] sm:$0xff] %vm1808, %v1515
  %1815 = vst.msk [vmem:[%s7 + $0x30] sm:$0xff] %vm1808, %v1520
  %1816 = vst.msk [vmem:[%s7 + $0x38] sm:$0xff] %vm1808, %v1525
  %1817 = vst.msk [vmem:[%s7 + $0x40] sm:$0xff] %vm1808, %v1530
  %1818 = vst.msk [vmem:[%s7 + $0x48] sm:$0xff] %vm1808, %v1535
  %1819 = vst.msk [vmem:[%s7 + $0x50] sm:$0xff] %vm1808, %v1540
  %1820 = vst.msk [vmem:[%s7 + $0x58] sm:$0xff] %vm1808, %v1545
  %1821 = vst.msk [vmem:[%s7 + $0x60] sm:$0xff] %vm1808, %v1550
  %1822 = vst.msk [vmem:[%s7 + $0x68] sm:$0xff] %vm1808, %v1555
  %1823 = vst.msk [vmem:[%s7 + $0x70] sm:$0xff] %vm1808, %v1560
  %1824 = vst.msk [vmem:[%s7 + $0x78] sm:$0xff] %vm1808, %v1565
  %1825 = vst.msk [vmem:[%s7 + $0x80] sm:$0xff] %vm1808, %v1570
  %1826 = vst.msk [vmem:[%s7 + $0x88] sm:$0xff] %vm1808, %v1575
  %1827 = vst.msk [vmem:[%s7 + $0x90] sm:$0xff] %vm1808, %v1580
  %1828 = vst.msk [vmem:[%s7 + $0x98] sm:$0xff] %vm1808, %v1585
  %1829 = vst.msk [vmem:[%s7 + $0xa0] sm:$0xff] %vm1808, %v1590
  %1830 = vst.msk [vmem:[%s7 + $0xa8] sm:$0xff] %vm1808, %v1595
  %1831 = vst.msk [vmem:[%s7 + $0xb0] sm:$0xff] %vm1808, %v1600
  %1832 = vst.msk [vmem:[%s7 + $0xb8] sm:$0xff] %vm1808, %v1605
  %1833 = vst.msk [vmem:[%s7 + $0xc0] sm:$0xff] %vm1808, %v1610
  %1834 = vst.msk [vmem:[%s7 + $0xc8] sm:$0xff] %vm1808, %v1615
  %1835 = vst.msk [vmem:[%s7 + $0xd0] sm:$0xff] %vm1808, %v1620
  %1836 = vst.msk [vmem:[%s7 + $0xd8] sm:$0xff] %vm1808, %v1625
  %1837 = vst.msk [vmem:[%s7 + $0xe0] sm:$0xff] %vm1808, %v1630
  %1838 = vst.msk [vmem:[%s7 + $0xe8] sm:$0xff] %vm1808, %v1635
  %1839 = vst.msk [vmem:[%s7 + $0xf0] sm:$0xff] %vm1808, %v1640
  %1840 = vst.msk [vmem:[%s7 + $0xf8] sm:$0xff] %vm1808, %v1645
  %1841 = vst.msk [vmem:[%s7 + $0x100] sm:$0xff] %vm1808, %v1650
  %1842 = vst.msk [vmem:[%s7 + $0x108] sm:$0xff] %vm1808, %v1655
  %1843 = vst.msk [vmem:[%s7 + $0x110] sm:$0xff] %vm1808, %v1660
  %1844 = vst.msk [vmem:[%s7 + $0x118] sm:$0xff] %vm1808, %v1665
  %1845 = vst.msk [vmem:[%s7 + $0x120] sm:$0xff] %vm1808, %v1670
  %1846 = vst.msk [vmem:[%s7 + $0x128] sm:$0xff] %vm1808, %v1675
  %1847 = vst.msk [vmem:[%s7 + $0x130] sm:$0xff] %vm1808, %v1680
  %1848 = vst.msk [vmem:[%s7 + $0x138] sm:$0xff] %vm1808, %v1685
  %1849 = vst.msk [vmem:[%s7 + $0x140] sm:$0xff] %vm1808, %v1690
  %1850 = vst.msk [vmem:[%s7 + $0x148] sm:$0xff] %vm1808, %v1695
  %1851 = vst.msk [vmem:[%s7 + $0x150] sm:$0xff] %vm1808, %v1700
  %1852 = vst.msk [vmem:[%s7 + $0x158] sm:$0xff] %vm1808, %v1705
  %1853 = vst.msk [vmem:[%s7 + $0x160] sm:$0xff] %vm1808, %v1710
  %1854 = vst.msk [vmem:[%s7 + $0x168] sm:$0xff] %vm1808, %v1715
  %1855 = vst.msk [vmem:[%s7 + $0x170] sm:$0xff] %vm1808, %v1720
  %1856 = vst.msk [vmem:[%s7 + $0x178] sm:$0xff] %vm1808, %v1725
  %1857 = vst.msk [vmem:[%s7 + $0x180] sm:$0xff] %vm1808, %v1730
  %1858 = vst.msk [vmem:[%s7 + $0x188] sm:$0xff] %vm1808, %v1735
  %1859 = vst.msk [vmem:[%s7 + $0x190] sm:$0xff] %vm1808, %v1740
  %1860 = vst.msk [vmem:[%s7 + $0x198] sm:$0xff] %vm1808, %v1745
  %1861 = vst.msk [vmem:[%s7 + $0x1a0] sm:$0xff] %vm1808, %v1750
  %1862 = vst.msk [vmem:[%s7 + $0x1a8] sm:$0xff] %vm1808, %v1755
  %1863 = vst.msk [vmem:[%s7 + $0x1b0] sm:$0xff] %vm1808, %v1760
  %1864 = vst.msk [vmem:[%s7 + $0x1b8] sm:$0xff] %vm1808, %v1765
  %1865 = vst.msk [vmem:[%s7 + $0x1c0] sm:$0xff] %vm1808, %v1770
  %1866 = vst.msk [vmem:[%s7 + $0x1c8] sm:$0xff] %vm1808, %v1775
  %1867 = vst.msk [vmem:[%s7 + $0x1d0] sm:$0xff] %vm1808, %v1780
  %1868 = vst.msk [vmem:[%s7 + $0x1d8] sm:$0xff] %vm1808, %v1785
  %1869 = vst.msk [vmem:[%s7 + $0x1e0] sm:$0xff] %vm1808, %v1790
  %1870 = vst.msk [vmem:[%s7 + $0x1e8] sm:$0xff] %vm1808, %v1795
  %1871 = vst.msk [vmem:[%s7 + $0x1f0] sm:$0xff] %vm1808, %v1800
  %1872 = vst.msk [vmem:[%s7 + $0x1f8] sm:$0xff] %vm1808, %v1805
  // Predicated region
  $region30: #{tpu_custom_call.1} parent=0 // pred_check
    _
  $region31: #{tpu_custom_call.1} parent=0 // pred_check_branch
    %1874 = sbr.rel (0) target = $region33
  $region32: #{tpu_custom_call.1} parent=0 // pred_region
    _
  $region33: #{tpu_custom_call.1} parent=0 // pred_fallthru
    _
  // Predicated region
  $region34: #{tpu_custom_call.1} parent=0 // pred_check
    _
  $region35: #{tpu_custom_call.1} parent=0 // pred_check_branch
    %1876 = sbr.rel (0) target = $region37
  $region36: #{tpu_custom_call.1} parent=0 // pred_region
    _
  $region37: #{tpu_custom_call.1} parent=0 // pred_fallthru
    _

</llo_original>
